<compile_context>
chip_gen: v7x
topology: tpu7x:2x2x1
jax: 0.10.0
libtpu: 0.0.40
codegen_flags: <defaults>
</compile_context>

<pallas_src>
import jax
import jax.numpy as jnp
from jax import lax
from jax.experimental import pallas as pl
from jax.experimental.pallas import tpu as pltpu


def _layer_norm(v, gamma, beta, eps=1e-5):
    # torch.nn.LayerNorm over the feature dim, biased variance, eps=1e-5.
    mu = jnp.mean(v, axis=-1, keepdims=True)
    var = jnp.mean(jnp.square(v - mu), axis=-1, keepdims=True)
    return (v - mu) * lax.rsqrt(var + eps) * gamma + beta


def _decoder_kernel(t_ref, len_ref, src_ref, tgt_ref, x_ref,
                    ln1_g_ref, ln1_b_ref, w1_ref, b1_ref,
                    ln2_g_ref, ln2_b_ref, w2_ref, b2_ref,
                    o_ref, numden_s, msgw_s, h_s):
    g = pl.program_id(0)
    c = pl.program_id(1)
    n_chunks = pl.num_programs(1)
    N, H = h_s.shape
    tE = src_ref.shape[-1]

    # ---- per-graph prologue (chunk 0): node-granular math hoisted out of the edge loop.
    @pl.when(c == 0)
    def _init():
        x = x_ref[0]                                            # (N, H) f32
        h = _layer_norm(x, ln1_g_ref[...], ln1_b_ref[...])
        h_s[...] = h
        t = t_ref[0]                                            # SMEM scalar (learned temperature)
        m = jnp.maximum(h, 0.0) + 1e-7                          # msg depends only on the source node
        # One global per-graph constant keeps exp() safe and is identical for every
        # target's softmax (and consistent across edge chunks) -> exact semantics.
        gmax = jnp.max(m * t)
        w = jnp.exp(m * t - gmax)                               # un-normalized softmax weight / node
        msgw_s[...] = jnp.concatenate([m * w, w], axis=-1).astype(msgw_s.dtype)
        numden_s[...] = jnp.zeros_like(numden_s)

    # ---- per-edge-chunk work: gather + scatter as one-hot matmuls on the MXU (bf16 operands).
    src = src_ref[0]                                            # (1, tE) int32
    tgt = tgt_ref[0]
    node_iota = lax.broadcasted_iota(jnp.int32, (N, tE), 0)
    src_oh = (node_iota == src).astype(jnp.bfloat16)            # (N, tE); dummy edges (idx==N) match nothing
    tgt_oh = (node_iota == tgt).astype(jnp.bfloat16)
    # gather: per-edge rows of [msg*w, w]  ->  (tE, 2H)
    vals = lax.dot_general(src_oh, msgw_s[...],
                           dimension_numbers=(((0,), (0,)), ((), ())),
                           preferred_element_type=jnp.float32)
    # fused scatter-add of [num, den] into the per-target accumulator  ->  (N, 2H)
    numden_s[...] += jnp.dot(tgt_oh, vals.astype(jnp.bfloat16),
                             preferred_element_type=jnp.float32)

    # ---- per-graph epilogue (last chunk): normalize softmax, GENConv MLP, residual, mask.
    @pl.when(c == n_chunks - 1)
    def _finish():
        h = h_s[...]
        nd = numden_s[...]
        num = nd[:, :H]
        den = nd[:, H:]
        agg = num * pl.reciprocal(den + 1e-16, approx=True)     # EUP divide
        o = agg + h                                             # + x_dst (= h)

        z = jnp.dot(o.astype(jnp.bfloat16), w1_ref[...],
                    preferred_element_type=jnp.float32) + b1_ref[...]
        z = jnp.maximum(_layer_norm(z, ln2_g_ref[...], ln2_b_ref[...]), 0.0)
        z = jnp.dot(z.astype(jnp.bfloat16), w2_ref[...],
                    preferred_element_type=jnp.float32) + b2_ref[...]

        y = x_ref[0] + z                                        # 'res+' residual
        row = lax.broadcasted_iota(jnp.int32, (N, H), 0)
        y = jnp.where(row < len_ref[g], y, 0.0)                 # AIGMAEBlock padding mask
        o_ref[0] = y.astype(o_ref.dtype)


def aigmae_decoder(input_nodes, input_edges, padding_mask,
                   ln1_g, ln1_b, w1, b1, ln2_g, ln2_b, w2, b2, t,
                   *, edge_tile=128):
    """input_nodes [G,N,H] f32, input_edges [G,2,E] int32, padding_mask [G,N] or None."""
    G, N, H = input_nodes.shape
    E = input_edges.shape[-1]
    Hm = w1.shape[1]                       # = 2*H (GENConv MLP expansion)

    # Edge chunking (reduction grid axis): pad E up to C * tE with inert edges (index N).
    tE = min(edge_tile, E)
    C = -(-E // tE)
    E_pad = C * tE
    src = input_edges[:, 0, :].astype(jnp.int32)
    tgt = input_edges[:, 1, :].astype(jnp.int32)
    if E_pad != E:
        pad = ((0, 0), (0, E_pad - E))
        src = jnp.pad(src, pad, constant_values=N)
        tgt = jnp.pad(tgt, pad, constant_values=N)
    src = src.reshape(G * C, 1, tE)
    tgt = tgt.reshape(G * C, 1, tE)

    # Per-graph valid length (prefix mask) -> built in-kernel; see TODO(synk) above.
    if padding_mask is None:
        lengths = jnp.full((G,), N, jnp.int32)
    else:
        lengths = jnp.sum(padding_mask.astype(jnp.int32), axis=-1)

    # bf16 MXU operands (weights pre-cast host-side halves their DMA bytes too).
    w1_bf = w1.astype(jnp.bfloat16)
    w2_bf = w2.astype(jnp.bfloat16)

    def edge_map(gi, ci):
        return (gi * C + ci, 0, 0)

    grid_spec = pltpu.PrefetchScalarGridSpec(
        num_scalar_prefetch=0,
        grid=(G, C),
        in_specs=[
            pl.BlockSpec(memory_space=pltpu.MemorySpace.SMEM),      # t (scalar)
            pl.BlockSpec(memory_space=pltpu.MemorySpace.SMEM),      # per-graph valid lengths
            pl.BlockSpec((1, 1, tE), edge_map),                     # src indices (chunk)
            pl.BlockSpec((1, 1, tE), edge_map),                     # tgt indices (chunk)
            pl.BlockSpec((1, N, H), lambda gi, ci: (gi, 0, 0)),     # x (resident across chunks)
            pl.BlockSpec((1, H), lambda gi, ci: (0, 0)),            # LN1 gamma
            pl.BlockSpec((1, H), lambda gi, ci: (0, 0)),            # LN1 beta
            pl.BlockSpec((H, Hm), lambda gi, ci: (0, 0)),           # MLP W1 (bf16)
            pl.BlockSpec((1, Hm), lambda gi, ci: (0, 0)),           # MLP b1
            pl.BlockSpec((1, Hm), lambda gi, ci: (0, 0)),           # LN2 gamma
            pl.BlockSpec((1, Hm), lambda gi, ci: (0, 0)),           # LN2 beta
            pl.BlockSpec((Hm, H), lambda gi, ci: (0, 0)),           # MLP W2 (bf16)
            pl.BlockSpec((1, H), lambda gi, ci: (0, 0)),            # MLP b2
        ],
        out_specs=pl.BlockSpec((1, N, H), lambda gi, ci: (gi, 0, 0)),  # lane-dense (N, H)
        scratch_shapes=[
            pltpu.VMEM((N, 2 * H), jnp.float32),    # [num, den] accumulator
            pltpu.VMEM((N, 2 * H), jnp.bfloat16),   # per-source-node [msg*w, w] MXU operand
            pltpu.VMEM((N, H), jnp.float32),        # h = LayerNorm(x)
        ],
    )

    # VMEM working-set estimate (double-buffered blocks + scratch) with headroom.
    per_step = (4 * N * H * 4                                    # x + out (double-buffered)
                + 2 * 2 * 2 * tE * 4                             # edge-index blocks
                + 2 * ((H * Hm + Hm * H) * 2 + (2 * H + 4 * Hm + H) * 4)  # weights/params
                + N * 2 * H * 4 + N * 2 * H * 2 + N * H * 4)     # scratch
    vmem_limit = int(min(max(4 * per_step, 8 * 1024 * 1024), 64 * 1024 * 1024))

    flops = int(G * (4 * E_pad * N * 2 * H        # gather + scatter one-hot matmuls
                     + 4 * N * H * Hm))           # GENConv MLP
    transcendentals = int(G * 2 * N * H)          # exp + approx reciprocal
    bytes_accessed = int(G * (2 * N * H * 4 + 2 * E_pad * 4)
                         + (H * Hm + Hm * H) * 2 + (2 * H + 4 * Hm + 2 * H) * 4)

    out = pl.pallas_call(
        _decoder_kernel,
        out_shape=jax.ShapeDtypeStruct((G, N, H), input_nodes.dtype),
        grid_spec=grid_spec,
        compiler_params=pltpu.CompilerParams(
            dimension_semantics=("parallel", "arbitrary"),
            vmem_limit_bytes=vmem_limit,
        ),
        cost_estimate=pl.CostEstimate(flops=flops,
                                      transcendentals=transcendentals,
                                      bytes_accessed=bytes_accessed),
    )(t, lengths, src, tgt, input_nodes,
      ln1_g, ln1_b, w1_bf, b1, ln2_g, ln2_b, w2_bf, b2)
    return out


def _ref_forward(x, edge_index, mask, ln1_g, ln1_b, w1, b1, ln2_g, ln2_b, w2, b2, t):
    """Pure-JAX f32 reference mirroring the PyTorch/PyG semantics (segment softmax)."""
    G, N, H = x.shape

    def ln(v, g_, b_):
        mu = v.mean(-1, keepdims=True)
        var = jnp.square(v - mu).mean(-1, keepdims=True)
        return (v - mu) / jnp.sqrt(var + 1e-5) * g_ + b_

    tval = t[0]
    outs = []
    for g in range(G):
        xg = x[g]
        src, tgt = edge_index[g, 0], edge_index[g, 1]
        h = ln(xg, ln1_g, ln1_b)
        msg = jax.nn.relu(h[src]) + 1e-7
        mt = msg * tval
        seg_max = jax.ops.segment_max(mt, tgt, num_segments=N)
        e = jnp.exp(mt - seg_max[tgt])
        denom = jax.ops.segment_sum(e, tgt, num_segments=N)
        alpha = e / (denom[tgt] + 1e-16)
        agg = jax.ops.segment_sum(msg * alpha, tgt, num_segments=N)
        o = agg + h
        z = o @ w1 + b1
        z = jax.nn.relu(ln(z, ln2_g, ln2_b))
        z = z @ w2 + b2
        outs.append((xg + z) * mask[g][:, None])
    return jnp.stack(outs)


if __name__ == "__main__":
    # Small shapes consistent with the module: G graphs, N nodes, E edges, hidden H.
    # E=240 with edge_tile=128 exercises the multi-chunk accumulation path (grid=(2,2)).
    G, N, E, H = 2, 16, 240, 32
    Hm = 2 * H

    key = jax.random.PRNGKey(0)
    keys = jax.random.split(key, 11)

    x = jax.random.normal(keys[0], (G, N, H), dtype=jnp.float32)
    src = jax.random.randint(keys[1], (G, E), 0, N, dtype=jnp.int32)
    tgt = jax.random.randint(keys[2], (G, E), 0, N, dtype=jnp.int32)
    edge_index = jnp.stack([src, tgt], axis=1)                     # (G, 2, E)
    lengths = jnp.array([N, N - 3])
    padding_mask = (jnp.arange(N)[None, :] < lengths[:, None]).astype(jnp.float32)

    # DeepGCNLayer nn.LayerNorm(H) affine params (perturbed from identity for a real test).
    ln1_g = 1.0 + 0.1 * jax.random.normal(keys[3], (1, H), jnp.float32)
    ln1_b = 0.1 * jax.random.normal(keys[4], (1, H), jnp.float32)
    # GENConv MLP: Linear(H,2H) -> LayerNorm(2H) -> ReLU -> Linear(2H,H); weights stored (in,out).
    s1 = 1.0 / jnp.sqrt(H)
    w1 = jax.random.uniform(keys[5], (H, Hm), jnp.float32, -s1, s1)
    b1 = jax.random.uniform(keys[6], (1, Hm), jnp.float32, -s1, s1)
    ln2_g = 1.0 + 0.1 * jax.random.normal(keys[7], (1, Hm), jnp.float32)
    ln2_b = 0.1 * jax.random.normal(keys[8], (1, Hm), jnp.float32)
    s2 = 1.0 / jnp.sqrt(Hm)
    w2 = jax.random.uniform(keys[9], (Hm, H), jnp.float32, -s2, s2)
    b2 = jax.random.uniform(keys[10], (1, H), jnp.float32, -s2, s2)
    t = jnp.array([1.0], dtype=jnp.float32)   # GENConv temperature (learn_t init value)

    out = aigmae_decoder(x, edge_index, padding_mask,
                         ln1_g, ln1_b, w1, b1, ln2_g, ln2_b, w2, b2, t)
    out = jax.block_until_ready(out)

    ref = _ref_forward(x, edge_index, padding_mask,
                       ln1_g, ln1_b, w1, b1, ln2_g, ln2_b, w2, b2, t)
    assert out.shape == (G, N, H)
    # bf16 MXU operands (perf feedback) -> tolerance loosened vs. the f32 reference.
    err = float(jnp.max(jnp.abs(out - ref)))
    assert jnp.allclose(out, ref, atol=5e-2, rtol=5e-2), err

    print("KERNEL_OK")
</pallas_src>

<mosaic_0001>
module attributes {stable_mosaic.version = 11 : i64} {
  func.func @_decoder_kernel(%arg0: i32, %arg1: i32, %arg2: memref<1xf32, #tpu.memory_space<smem>>, %arg3: memref<2xi32, #tpu.memory_space<smem>>, %arg4: memref<1x1x128xi32, #tpu.memory_space<vmem>>, %arg5: memref<1x1x128xi32, #tpu.memory_space<vmem>>, %arg6: memref<1x16x32xf32, #tpu.memory_space<vmem>>, %arg7: memref<1x32xf32, #tpu.memory_space<vmem>>, %arg8: memref<1x32xf32, #tpu.memory_space<vmem>>, %arg9: memref<32x64xbf16, #tpu.memory_space<vmem>>, %arg10: memref<1x64xf32, #tpu.memory_space<vmem>>, %arg11: memref<1x64xf32, #tpu.memory_space<vmem>>, %arg12: memref<1x64xf32, #tpu.memory_space<vmem>>, %arg13: memref<64x32xbf16, #tpu.memory_space<vmem>>, %arg14: memref<1x32xf32, #tpu.memory_space<vmem>>, %arg15: memref<1x16x32xf32, #tpu.memory_space<vmem>>, %arg16: memref<16x64xf32, #tpu.memory_space<vmem>>, %arg17: memref<16x64xbf16, #tpu.memory_space<vmem>>, %arg18: memref<16x32xf32, #tpu.memory_space<vmem>>) attributes {dimension_semantics = [#tpu.dimension_semantics<parallel>, #tpu.dimension_semantics<arbitrary>], iteration_bounds = array<i64: 2, 2>, scalar_prefetch = 0 : i64, scratch_operands = 3 : i64, tpu.core_type = #tpu.core_type<tc>, window_params = [{transform_indices = @transform_0, window_bounds = array<i64: 1>}, {transform_indices = @transform_1, window_bounds = array<i64: 2>}, {transform_indices = @transform_2, window_bounds = array<i64: 1, 1, 128>}, {transform_indices = @transform_3, window_bounds = array<i64: 1, 1, 128>}, {transform_indices = @transform_4, window_bounds = array<i64: 1, 16, 32>}, {pipeline_mode = #tpu.pipeline_mode<synchronous>, transform_indices = @transform_5, window_bounds = array<i64: 1, 32>}, {pipeline_mode = #tpu.pipeline_mode<synchronous>, transform_indices = @transform_6, window_bounds = array<i64: 1, 32>}, {pipeline_mode = #tpu.pipeline_mode<synchronous>, transform_indices = @transform_7, window_bounds = array<i64: 32, 64>}, {pipeline_mode = #tpu.pipeline_mode<synchronous>, transform_indices = @transform_8, window_bounds = array<i64: 1, 64>}, {pipeline_mode = #tpu.pipeline_mode<synchronous>, transform_indices = @transform_9, window_bounds = array<i64: 1, 64>}, {pipeline_mode = #tpu.pipeline_mode<synchronous>, transform_indices = @transform_10, window_bounds = array<i64: 1, 64>}, {pipeline_mode = #tpu.pipeline_mode<synchronous>, transform_indices = @transform_11, window_bounds = array<i64: 64, 32>}, {pipeline_mode = #tpu.pipeline_mode<synchronous>, transform_indices = @transform_12, window_bounds = array<i64: 1, 32>}, {transform_indices = @transform_13, window_bounds = array<i64: 1, 16, 32>}]} {
    %c0_i32 = arith.constant 0 : i32
    %0 = arith.cmpi eq, %arg1, %c0_i32 : i32
    %1 = arith.extui %0 : i1 to i32
    %c0_i32_0 = arith.constant 0 : i32
    %2 = arith.cmpi ne, %1, %c0_i32_0 : i32
    scf.if %2 {
      %c0_14 = arith.constant 0 : index
      %c0_15 = arith.constant 0 : index
      %c0_16 = arith.constant 0 : index
      %28 = vector.load %arg6[%c0_14, %c0_15, %c0_16] : memref<1x16x32xf32, #tpu.memory_space<vmem>>, vector<1x16x32xf32>
      %29 = vector.shape_cast %28 : vector<1x16x32xf32> to vector<16x32xf32>
      %c0_17 = arith.constant 0 : index
      %c0_18 = arith.constant 0 : index
      %30 = vector.load %arg7[%c0_17, %c0_18] : memref<1x32xf32, #tpu.memory_space<vmem>>, vector<1x32xf32>
      %c0_19 = arith.constant 0 : index
      %c0_20 = arith.constant 0 : index
      %31 = vector.load %arg8[%c0_19, %c0_20] : memref<1x32xf32, #tpu.memory_space<vmem>>, vector<1x32xf32>
      %cst_21 = arith.constant dense<0.000000e+00> : vector<16xf32>
      %32 = vector.multi_reduction <add>, %29, %cst_21 [1] : vector<16x32xf32> to vector<16xf32>
      %33 = vector.shape_cast %32 : vector<16xf32> to vector<16x1xf32>
      %cst_22 = arith.constant 3.200000e+01 : f32
      %34 = vector.broadcast %cst_22 : f32 to vector<16x1xf32>
      %35 = arith.divf %33, %34 : vector<16x1xf32>
      %36 = vector.broadcast %35 : vector<16x1xf32> to vector<16x32xf32>
      %37 = arith.subf %29, %36 : vector<16x32xf32>
      %38 = arith.mulf %37, %37 : vector<16x32xf32>
      %cst_23 = arith.constant dense<0.000000e+00> : vector<16xf32>
      %39 = vector.multi_reduction <add>, %38, %cst_23 [1] : vector<16x32xf32> to vector<16xf32>
      %40 = vector.shape_cast %39 : vector<16xf32> to vector<16x1xf32>
      %cst_24 = arith.constant 3.200000e+01 : f32
      %41 = vector.broadcast %cst_24 : f32 to vector<16x1xf32>
      %42 = arith.divf %40, %41 : vector<16x1xf32>
      %43 = vector.broadcast %35 : vector<16x1xf32> to vector<16x32xf32>
      %44 = arith.subf %29, %43 : vector<16x32xf32>
      %cst_25 = arith.constant 9.99999974E-6 : f32
      %45 = vector.broadcast %cst_25 : f32 to vector<16x1xf32>
      %46 = arith.addf %42, %45 : vector<16x1xf32>
      %47 = math.rsqrt %46 : vector<16x1xf32>
      %48 = vector.broadcast %47 : vector<16x1xf32> to vector<16x32xf32>
      %49 = arith.mulf %44, %48 : vector<16x32xf32>
      %50 = vector.broadcast %30 : vector<1x32xf32> to vector<16x32xf32>
      %51 = arith.mulf %49, %50 : vector<16x32xf32>
      %52 = vector.broadcast %31 : vector<1x32xf32> to vector<16x32xf32>
      %53 = arith.addf %51, %52 : vector<16x32xf32>
      %c0_26 = arith.constant 0 : index
      %c0_27 = arith.constant 0 : index
      %54 = vector.load %arg18[%c0_26, %c0_27] : memref<16x32xf32, #tpu.memory_space<vmem>>, vector<16x32xf32>
      tpu.vector_store %arg18[%c0_26, %c0_27], %53 {strides = array<i32>} : memref<16x32xf32, #tpu.memory_space<vmem>>, vector<16x32xf32>,
      %c0_28 = arith.constant 0 : index
      %55 = memref.load %arg2[%c0_28] : memref<1xf32, #tpu.memory_space<smem>>
      %cst_29 = arith.constant 0.000000e+00 : f32
      %56 = vector.broadcast %cst_29 : f32 to vector<16x32xf32>
      %57 = arith.maximumf %53, %56 : vector<16x32xf32>
      %cst_30 = arith.constant 1.000000e-07 : f32
      %58 = vector.broadcast %cst_30 : f32 to vector<16x32xf32>
      %59 = arith.addf %57, %58 : vector<16x32xf32>
      %60 = vector.broadcast %55 : f32 to vector<16x32xf32>
      %61 = arith.mulf %59, %60 : vector<16x32xf32>
      %62 = vector.shape_cast %61 : vector<16x32xf32> to vector<1x16x32xf32>
      %cst_31 = arith.constant dense<0xFF800000> : vector<1xf32>
      %63 = vector.multi_reduction <maximumf>, %62, %cst_31 [1, 2] : vector<1x16x32xf32> to vector<1xf32>
      %64 = vector.shape_cast %63 : vector<1xf32> to vector<1x1x1xf32>
      %65 = vector.extract %64[0, 0, 0] : f32 from vector<1x1x1xf32>
      %66 = vector.broadcast %55 : f32 to vector<16x32xf32>
      %67 = arith.mulf %59, %66 : vector<16x32xf32>
      %68 = vector.broadcast %65 : f32 to vector<16x32xf32>
      %69 = arith.subf %67, %68 : vector<16x32xf32>
      %70 = math.exp %69 : vector<16x32xf32>
      %71 = arith.mulf %59, %70 : vector<16x32xf32>
      %72 = tpu.concatenate %71, %70 in 1 : vector<16x32xf32>, vector<16x32xf32> -> vector<16x64xf32>
      %73 = arith.truncf %72 : vector<16x64xf32> to vector<16x64xbf16>
      %c0_32 = arith.constant 0 : index
      %c0_33 = arith.constant 0 : index
      %74 = vector.load %arg17[%c0_32, %c0_33] : memref<16x64xbf16, #tpu.memory_space<vmem>>, vector<16x64xbf16>
      tpu.vector_store %arg17[%c0_32, %c0_33], %73 {strides = array<i32>} : memref<16x64xbf16, #tpu.memory_space<vmem>>, vector<16x64xbf16>,
      %cst_34 = arith.constant 0.000000e+00 : f32
      %75 = vector.broadcast %cst_34 : f32 to vector<16x64xf32>
      %c0_35 = arith.constant 0 : index
      %c0_36 = arith.constant 0 : index
      %76 = vector.load %arg16[%c0_35, %c0_36] : memref<16x64xf32, #tpu.memory_space<vmem>>, vector<16x64xf32>
      tpu.vector_store %arg16[%c0_35, %c0_36], %75 {strides = array<i32>} : memref<16x64xf32, #tpu.memory_space<vmem>>, vector<16x64xf32>,
    } else {
    }
    %c0 = arith.constant 0 : index
    %c0_1 = arith.constant 0 : index
    %c0_2 = arith.constant 0 : index
    %3 = vector.load %arg4[%c0, %c0_1, %c0_2] : memref<1x1x128xi32, #tpu.memory_space<vmem>>, vector<1x1x128xi32>
    %4 = vector.shape_cast %3 : vector<1x1x128xi32> to vector<1x128xi32>
    %c0_3 = arith.constant 0 : index
    %c0_4 = arith.constant 0 : index
    %c0_5 = arith.constant 0 : index
    %5 = vector.load %arg5[%c0_3, %c0_4, %c0_5] : memref<1x1x128xi32, #tpu.memory_space<vmem>>, vector<1x1x128xi32>
    %6 = vector.shape_cast %5 : vector<1x1x128xi32> to vector<1x128xi32>
    %7 = tpu.iota {dimensions = array<i32: 0>} : vector<16x128xi32>
    %8 = vector.broadcast %4 : vector<1x128xi32> to vector<16x128xi32>
    %9 = arith.cmpi eq, %7, %8 : vector<16x128xi32>
    %10 = arith.extui %9 : vector<16x128xi1> to vector<16x128xi32>
    %11 = arith.sitofp %10 : vector<16x128xi32> to vector<16x128xf32>
    %12 = arith.truncf %11 : vector<16x128xf32> to vector<16x128xbf16>
    %13 = vector.broadcast %6 : vector<1x128xi32> to vector<16x128xi32>
    %14 = arith.cmpi eq, %7, %13 : vector<16x128xi32>
    %15 = arith.extui %14 : vector<16x128xi1> to vector<16x128xi32>
    %16 = arith.sitofp %15 : vector<16x128xi32> to vector<16x128xf32>
    %17 = arith.truncf %16 : vector<16x128xf32> to vector<16x128xbf16>
    %c0_6 = arith.constant 0 : index
    %c0_7 = arith.constant 0 : index
    %18 = vector.load %arg17[%c0_6, %c0_7] : memref<16x64xbf16, #tpu.memory_space<vmem>>, vector<16x64xbf16>
    %cst = arith.constant dense<0.000000e+00> : vector<128x64xf32>
    %19 = tpu.matmul %12, %18, %cst {dimension_numbers = #tpu.dot_dimension_numbers<[0], [0], [1], [1], [0, 1, 1, 1], [], []>} : vector<16x128xbf16>, vector<16x64xbf16>, vector<128x64xf32> -> vector<128x64xf32>
    %c0_8 = arith.constant 0 : index
    %c0_9 = arith.constant 0 : index
    %20 = vector.load %arg16[%c0_8, %c0_9] : memref<16x64xf32, #tpu.memory_space<vmem>>, vector<16x64xf32>
    %21 = arith.truncf %19 : vector<128x64xf32> to vector<128x64xbf16>
    %cst_10 = arith.constant dense<0.000000e+00> : vector<16x64xf32>
    %22 = tpu.matmul %17, %21, %cst_10 {dimension_numbers = #tpu.dot_dimension_numbers<[1], [0], [0], [1], [0, 0, 1, 1], [], []>} : vector<16x128xbf16>, vector<128x64xbf16>, vector<16x64xf32> -> vector<16x64xf32>
    %23 = arith.addf %20, %22 : vector<16x64xf32>
    %c0_11 = arith.constant 0 : index
    %c0_12 = arith.constant 0 : index
    %24 = vector.load %arg16[%c0_11, %c0_12] : memref<16x64xf32, #tpu.memory_space<vmem>>, vector<16x64xf32>
    tpu.vector_store %arg16[%c0_11, %c0_12], %23 {strides = array<i32>} : memref<16x64xf32, #tpu.memory_space<vmem>>, vector<16x64xf32>,
    %c1_i32 = arith.constant 1 : i32
    %25 = arith.cmpi eq, %arg1, %c1_i32 : i32
    %26 = arith.extui %25 : i1 to i32
    %c0_i32_13 = arith.constant 0 : i32
    %27 = arith.cmpi ne, %26, %c0_i32_13 : i32
    scf.if %27 {
      %c0_14 = arith.constant 0 : index
      %c0_15 = arith.constant 0 : index
      %28 = vector.load %arg18[%c0_14, %c0_15] : memref<16x32xf32, #tpu.memory_space<vmem>>, vector<16x32xf32>
      %c0_16 = arith.constant 0 : index
      %c0_17 = arith.constant 0 : index
      %29 = vector.load %arg16[%c0_16, %c0_17] : memref<16x64xf32, #tpu.memory_space<vmem>>, vector<16x64xf32>
      %30 = vector.extract_strided_slice %29 {offsets = [0, 0], sizes = [16, 32], strides = [1, 1]} : vector<16x64xf32> to vector<16x32xf32>
      %31 = vector.extract_strided_slice %29 {offsets = [0, 32], sizes = [16, 32], strides = [1, 1]} : vector<16x64xf32> to vector<16x32xf32>
      %cst_18 = arith.constant 1.000000e-16 : f32
      %32 = vector.broadcast %cst_18 : f32 to vector<16x32xf32>
      %33 = arith.addf %31, %32 : vector<16x32xf32>
      %34 = tpu.reciprocal %33 {approx = true} : vector<16x32xf32> -> vector<16x32xf32>
      %35 = arith.mulf %30, %34 : vector<16x32xf32>
      %36 = arith.addf %35, %28 : vector<16x32xf32>
      %37 = arith.truncf %36 : vector<16x32xf32> to vector<16x32xbf16>
      %c0_19 = arith.constant 0 : index
      %c0_20 = arith.constant 0 : index
      %38 = vector.load %arg9[%c0_19, %c0_20] : memref<32x64xbf16, #tpu.memory_space<vmem>>, vector<32x64xbf16>
      %cst_21 = arith.constant dense<0.000000e+00> : vector<16x64xf32>
      %39 = tpu.matmul %37, %38, %cst_21 {dimension_numbers = #tpu.dot_dimension_numbers<[1], [0], [0], [1], [0, 0, 1, 1], [], []>} : vector<16x32xbf16>, vector<32x64xbf16>, vector<16x64xf32> -> vector<16x64xf32>
      %c0_22 = arith.constant 0 : index
      %c0_23 = arith.constant 0 : index
      %40 = vector.load %arg10[%c0_22, %c0_23] : memref<1x64xf32, #tpu.memory_space<vmem>>, vector<1x64xf32>
      %41 = vector.broadcast %40 : vector<1x64xf32> to vector<16x64xf32>
      %42 = arith.addf %39, %41 : vector<16x64xf32>
      %c0_24 = arith.constant 0 : index
      %c0_25 = arith.constant 0 : index
      %43 = vector.load %arg11[%c0_24, %c0_25] : memref<1x64xf32, #tpu.memory_space<vmem>>, vector<1x64xf32>
      %c0_26 = arith.constant 0 : index
      %c0_27 = arith.constant 0 : index
      %44 = vector.load %arg12[%c0_26, %c0_27] : memref<1x64xf32, #tpu.memory_space<vmem>>, vector<1x64xf32>
      %cst_28 = arith.constant dense<0.000000e+00> : vector<16xf32>
      %45 = vector.multi_reduction <add>, %42, %cst_28 [1] : vector<16x64xf32> to vector<16xf32>
      %46 = vector.shape_cast %45 : vector<16xf32> to vector<16x1xf32>
      %cst_29 = arith.constant 6.400000e+01 : f32
      %47 = vector.broadcast %cst_29 : f32 to vector<16x1xf32>
      %48 = arith.divf %46, %47 : vector<16x1xf32>
      %49 = vector.broadcast %48 : vector<16x1xf32> to vector<16x64xf32>
      %50 = arith.subf %42, %49 : vector<16x64xf32>
      %51 = arith.mulf %50, %50 : vector<16x64xf32>
      %cst_30 = arith.constant dense<0.000000e+00> : vector<16xf32>
      %52 = vector.multi_reduction <add>, %51, %cst_30 [1] : vector<16x64xf32> to vector<16xf32>
      %53 = vector.shape_cast %52 : vector<16xf32> to vector<16x1xf32>
      %cst_31 = arith.constant 6.400000e+01 : f32
      %54 = vector.broadcast %cst_31 : f32 to vector<16x1xf32>
      %55 = arith.divf %53, %54 : vector<16x1xf32>
      %56 = vector.broadcast %48 : vector<16x1xf32> to vector<16x64xf32>
      %57 = arith.subf %42, %56 : vector<16x64xf32>
      %cst_32 = arith.constant 9.99999974E-6 : f32
      %58 = vector.broadcast %cst_32 : f32 to vector<16x1xf32>
      %59 = arith.addf %55, %58 : vector<16x1xf32>
      %60 = math.rsqrt %59 : vector<16x1xf32>
      %61 = vector.broadcast %60 : vector<16x1xf32> to vector<16x64xf32>
      %62 = arith.mulf %57, %61 : vector<16x64xf32>
      %63 = vector.broadcast %43 : vector<1x64xf32> to vector<16x64xf32>
      %64 = arith.mulf %62, %63 : vector<16x64xf32>
      %65 = vector.broadcast %44 : vector<1x64xf32> to vector<16x64xf32>
      %66 = arith.addf %64, %65 : vector<16x64xf32>
      %cst_33 = arith.constant 0.000000e+00 : f32
      %67 = vector.broadcast %cst_33 : f32 to vector<16x64xf32>
      %68 = arith.maximumf %66, %67 : vector<16x64xf32>
      %69 = arith.truncf %68 : vector<16x64xf32> to vector<16x64xbf16>
      %c0_34 = arith.constant 0 : index
      %c0_35 = arith.constant 0 : index
      %70 = vector.load %arg13[%c0_34, %c0_35] : memref<64x32xbf16, #tpu.memory_space<vmem>>, vector<64x32xbf16>
      %cst_36 = arith.constant dense<0.000000e+00> : vector<16x32xf32>
      %71 = tpu.matmul %69, %70, %cst_36 {dimension_numbers = #tpu.dot_dimension_numbers<[1], [0], [0], [1], [0, 0, 1, 1], [], []>} : vector<16x64xbf16>, vector<64x32xbf16>, vector<16x32xf32> -> vector<16x32xf32>
      %c0_37 = arith.constant 0 : index
      %c0_38 = arith.constant 0 : index
      %72 = vector.load %arg14[%c0_37, %c0_38] : memref<1x32xf32, #tpu.memory_space<vmem>>, vector<1x32xf32>
      %73 = vector.broadcast %72 : vector<1x32xf32> to vector<16x32xf32>
      %74 = arith.addf %71, %73 : vector<16x32xf32>
      %c0_39 = arith.constant 0 : index
      %c0_40 = arith.constant 0 : index
      %c0_41 = arith.constant 0 : index
      %75 = vector.load %arg6[%c0_39, %c0_40, %c0_41] : memref<1x16x32xf32, #tpu.memory_space<vmem>>, vector<1x16x32xf32>
      %76 = vector.shape_cast %75 : vector<1x16x32xf32> to vector<16x32xf32>
      %77 = arith.addf %76, %74 : vector<16x32xf32>
      %78 = tpu.iota {dimensions = array<i32: 0>} : vector<16x32xi32>
      %79 = arith.index_cast %arg0 : i32 to index
      %80 = memref.load %arg3[%79] : memref<2xi32, #tpu.memory_space<smem>>
      %81 = vector.broadcast %80 : i32 to vector<16x32xi32>
      %82 = arith.cmpi slt, %78, %81 : vector<16x32xi32>
      %cst_42 = arith.constant 0.000000e+00 : f32
      %83 = vector.broadcast %cst_42 : f32 to vector<16x32xf32>
      %84 = arith.select %82, %77, %83 : vector<16x32xi1>, vector<16x32xf32>
      %c0_43 = arith.constant 0 : index
      %c0_44 = arith.constant 0 : index
      %c0_45 = arith.constant 0 : index
      %85 = vector.load %arg15[%c0_43, %c0_44, %c0_45] : memref<1x16x32xf32, #tpu.memory_space<vmem>>, vector<1x16x32xf32>
      %86 = vector.shape_cast %85 : vector<1x16x32xf32> to vector<16x32xf32>
      %87 = vector.shape_cast %84 : vector<16x32xf32> to vector<1x16x32xf32>
      tpu.vector_store %arg15[%c0_43, %c0_44, %c0_45], %87 {strides = array<i32>} : memref<1x16x32xf32, #tpu.memory_space<vmem>>, vector<1x16x32xf32>,
    } else {
    }
    return
  }
  func.func @transform_0(%arg0: i32, %arg1: i32) -> i32 {
    %c0_i32 = arith.constant 0 : i32
    %c0_i32_0 = arith.constant 0 : i32
    return %c0_i32 : i32
  }
  func.func @transform_1(%arg0: i32, %arg1: i32) -> i32 {
    %c0_i32 = arith.constant 0 : i32
    %c0_i32_0 = arith.constant 0 : i32
    return %c0_i32 : i32
  }
  func.func @transform_2(%arg0: i32, %arg1: i32) -> (i32, i32, i32) {
    %c2_i32 = arith.constant 2 : i32
    %0 = arith.muli %arg0, %c2_i32 : i32
    %1 = arith.addi %0, %arg1 : i32
    %c0_i32 = arith.constant 0 : i32
    %c0_i32_0 = arith.constant 0 : i32
    %c0_i32_1 = arith.constant 0 : i32
    return %1, %c0_i32, %c0_i32_0 : i32, i32, i32
  }
  func.func @transform_3(%arg0: i32, %arg1: i32) -> (i32, i32, i32) {
    %c2_i32 = arith.constant 2 : i32
    %0 = arith.muli %arg0, %c2_i32 : i32
    %1 = arith.addi %0, %arg1 : i32
    %c0_i32 = arith.constant 0 : i32
    %c0_i32_0 = arith.constant 0 : i32
    %c0_i32_1 = arith.constant 0 : i32
    return %1, %c0_i32, %c0_i32_0 : i32, i32, i32
  }
  func.func @transform_4(%arg0: i32, %arg1: i32) -> (i32, i32, i32) {
    %c0_i32 = arith.constant 0 : i32
    %c0_i32_0 = arith.constant 0 : i32
    %c0_i32_1 = arith.constant 0 : i32
    return %arg0, %c0_i32, %c0_i32_0 : i32, i32, i32
  }
  func.func @transform_5(%arg0: i32, %arg1: i32) -> (i32, i32) {
    %c0_i32 = arith.constant 0 : i32
    %c0_i32_0 = arith.constant 0 : i32
    %c0_i32_1 = arith.constant 0 : i32
    return %c0_i32, %c0_i32_0 : i32, i32
  }
  func.func @transform_6(%arg0: i32, %arg1: i32) -> (i32, i32) {
    %c0_i32 = arith.constant 0 : i32
    %c0_i32_0 = arith.constant 0 : i32
    %c0_i32_1 = arith.constant 0 : i32
    return %c0_i32, %c0_i32_0 : i32, i32
  }
  func.func @transform_7(%arg0: i32, %arg1: i32) -> (i32, i32) {
    %c0_i32 = arith.constant 0 : i32
    %c0_i32_0 = arith.constant 0 : i32
    %c0_i32_1 = arith.constant 0 : i32
    return %c0_i32, %c0_i32_0 : i32, i32
  }
  func.func @transform_8(%arg0: i32, %arg1: i32) -> (i32, i32) {
    %c0_i32 = arith.constant 0 : i32
    %c0_i32_0 = arith.constant 0 : i32
    %c0_i32_1 = arith.constant 0 : i32
    return %c0_i32, %c0_i32_0 : i32, i32
  }
  func.func @transform_9(%arg0: i32, %arg1: i32) -> (i32, i32) {
    %c0_i32 = arith.constant 0 : i32
    %c0_i32_0 = arith.constant 0 : i32
    %c0_i32_1 = arith.constant 0 : i32
    return %c0_i32, %c0_i32_0 : i32, i32
  }
  func.func @transform_10(%arg0: i32, %arg1: i32) -> (i32, i32) {
    %c0_i32 = arith.constant 0 : i32
    %c0_i32_0 = arith.constant 0 : i32
    %c0_i32_1 = arith.constant 0 : i32
    return %c0_i32, %c0_i32_0 : i32, i32
  }
  func.func @transform_11(%arg0: i32, %arg1: i32) -> (i32, i32) {
    %c0_i32 = arith.constant 0 : i32
    %c0_i32_0 = arith.constant 0 : i32
    %c0_i32_1 = arith.constant 0 : i32
    return %c0_i32, %c0_i32_0 : i32, i32
  }
  func.func @transform_12(%arg0: i32, %arg1: i32) -> (i32, i32) {
    %c0_i32 = arith.constant 0 : i32
    %c0_i32_0 = arith.constant 0 : i32
    %c0_i32_1 = arith.constant 0 : i32
    return %c0_i32, %c0_i32_0 : i32, i32
  }
  func.func @transform_13(%arg0: i32, %arg1: i32) -> (i32, i32, i32) {
    %c0_i32 = arith.constant 0 : i32
    %c0_i32_0 = arith.constant 0 : i32
    %c0_i32_1 = arith.constant 0 : i32
    return %arg0, %c0_i32, %c0_i32_0 : i32, i32, i32
  }
}

</mosaic_0001>

<llo_original>
// kernel: tpu_custom_call.1
$region0: #{tpu_custom_call.1}
  #allocation0 [shape = 'u32[]', space=smem, size = 0x4, offset = 0x4, fixed_abs, tag = 'smem constant byte address 0x4 - core index']
  #allocation1 [shape = 'u32[144,128]{1,0:T(1,128)}', space=vmem, size = 0x12000, scoped, tag = 'internal scratch']
  #allocation2 [shape = 'f32[16,64]{1,0:T(8,128)}', space=vmem, size = 0x2000, scoped, tag = 'scratch operand']
  #allocation3 [shape = 'bf16[16,64]{1,0:T(16,128)(2,1)}', space=vmem, size = 0x1000, scoped, tag = 'scratch operand']
  #allocation4 [shape = 'f32[16,32]{1,0:T(8,128)}', space=vmem, size = 0x2000, scoped, tag = 'scratch operand']
  #allocation5 [shape = 'f32[1]{0:T(128)S(6)}', space=smem, size = 0x200, scoped, tag = 'scoped memory for tpu_custom_call.1']
  %s0 = inlined_call_operand.<no memory space> [shape: f32[1], index: 0, kind: input, shape index: {}]
  %s1 = inlined_call_operand.vmem [shape: s32[2], index: 1, kind: input, shape index: {}]
  %s2 = inlined_call_operand.vmem [shape: s32[4,1,128], index: 2, kind: input, shape index: {}]
  %s3 = inlined_call_operand.vmem [shape: s32[4,1,128], index: 3, kind: input, shape index: {}]
  %s4 = inlined_call_operand.vmem [shape: f32[2,16,32], index: 4, kind: input, shape index: {}]
  %s5 = inlined_call_operand.vmem [shape: f32[1,32], index: 5, kind: input, shape index: {}]
  %s6 = inlined_call_operand.vmem [shape: f32[1,32], index: 6, kind: input, shape index: {}]
  %s7 = inlined_call_operand.vmem [shape: bf16[32,64], index: 7, kind: input, shape index: {}]
  %s8 = inlined_call_operand.vmem [shape: f32[1,64], index: 8, kind: input, shape index: {}]
  %s9 = inlined_call_operand.vmem [shape: f32[1,64], index: 9, kind: input, shape index: {}]
  %s10 = inlined_call_operand.vmem [shape: f32[1,64], index: 10, kind: input, shape index: {}]
  %s11 = inlined_call_operand.vmem [shape: bf16[64,32], index: 11, kind: input, shape index: {}]
  %s12 = inlined_call_operand.vmem [shape: f32[1,32], index: 12, kind: input, shape index: {}]
  %s13 = inlined_call_operand.hbm [shape: f32[2,16,32], index: 13, kind: output, shape index: {}]
  %s14 = sld [smem:[#allocation0]]
  $region97: #{tpu_custom_call.1} parent=0
    _
  %s16 = ssub.s32 1, %s14
  %s17 = scalar_select 0, %s16, %s14
  %18 = sst [smem:[#allocation5]] %s0
  $region1: #{tpu_custom_call.1} parent=0
    #allocation6 [shape = 'u8[512]{0}', space=smem, size = 0x200, scoped, tag = 'input window, operand 1, single buffered']
    #allocation7 [shape = 's32[2]{0}', space=sflag, size = 0x8, scoped, tag = 'scoped memory for tpu_custom_call.1']
    #allocation8 [shape = 's32[2]{0}', space=sflag, size = 0x8, scoped, tag = 'scoped memory for tpu_custom_call.1']
    #allocation9 [shape = 'u8[16384]{0}', space=vmem, size = 0x4000, scoped, tag = 'output window, operand 0']
    %19 = vsyncpa [#allocation8], 0
    %20 = vsyncpa [#allocation7], 0
    %s21 = scalar_lea.sflag [#allocation7], 1
    %22 = vsyncpa %s21, 0
    loop: start=0, step=1, limit=6
    $region2: #{tpu_custom_call.1} parent=1 // loop_pre_header
      _
    $region3: #{tpu_custom_call.1} parent=1 // loop_header
      %s24 = sphi 0, %s28
      %p25 = scmp.ge.s32.totalorder %s24, 6
      %s31 = sphi 0, %s43
      %s32 = sphi 0, %s39
      %s33 = sphi 0, %s31
      %s34 = sphi 0, %s32
      %s35 = sphi 0, %s33
      %s36 = sphi 0, %s34
      %s44 = sphi 0, %s44
      %s46 = sphi 0, %s44
      %s47 = sphi 0, %s46
      %s61 = sphi 0, %s47
      %s65 = sphi 0, %s65
      %s67 = sphi 0, %s65
      %s68 = sphi 0, %s67
      %s82 = sphi 0, %s68
      %s92 = sphi 0, %s94
      %s95 = sphi 0, %s92
      %s96 = sphi 0, %s95
      %s112 = sphi 0, %s96
      %s122 = sphi 0, %s124
      %s125 = sphi 0, %s122
      %s126 = sphi 0, %s125
      %s142 = sphi 0, %s126
      %s148 = sphi 0, %s150
      %s151 = sphi 0, %s148
      %s152 = sphi 0, %s151
      %s168 = sphi 0, %s152
      %s172 = sphi 0, %s172
      %s174 = sphi 0, %s172
      %s175 = sphi 0, %s174
      %s189 = sphi 0, %s175
      %s193 = sphi 0, %s193
      %s195 = sphi 0, %s193
      %s196 = sphi 0, %s195
      %s210 = sphi 0, %s196
      %s214 = sphi 0, %s214
      %s216 = sphi 0, %s214
      %s217 = sphi 0, %s216
      %s231 = sphi 0, %s217
      %s235 = sphi 0, %s235
      %s237 = sphi 0, %s235
      %s238 = sphi 0, %s237
      %s252 = sphi 0, %s238
      %s256 = sphi 0, %s256
      %s258 = sphi 0, %s256
      %s259 = sphi 0, %s258
      %s273 = sphi 0, %s259
      %s277 = sphi 0, %s277
      %s279 = sphi 0, %s277
      %s280 = sphi 0, %s279
      %s294 = sphi 0, %s280
      %s298 = sphi 0, %s298
      %s300 = sphi 0, %s298
      %s301 = sphi 0, %s300
      %s315 = sphi 0, %s301
      %s319 = sphi 0, %s319
      %s321 = sphi 0, %s319
      %s322 = sphi 0, %s321
      %s336 = sphi 0, %s322
      %s342 = sphi 0, %s344
      %s345 = sphi 0, %s342
      %s346 = sphi 0, %s345
      %s362 = sphi 0, %s346
    $region4: #{tpu_custom_call.1} parent=1 // loop_header_branch
      %27 = sbr.rel (%p25) target = $region8
    $region5: #{tpu_custom_call.1} parent=1 // loop_body
      %s29 = ssub.s32 %s24, 1
      %s30 = ssub.s32 %s24, 2
      %s37 = sadd.s32 1, %s32
      %p38 = scmp.ge.s32.totalorder %s37, 2
      %s39 = scalar_select %p38, 0, %s37
      %s40 = sadd.s32 1, %s31
      %s41 = scalar_select %p38, %s40, %s31
      %p42 = scmp.ge.s32.totalorder %s41, 2
      %s43 = scalar_select %p42, 0, %s41
      %s45 = sadd.s32 %s44, 1
      %p48 = scmp.eq.s32.totalorder %s24, 3
      %p49 = scmp.ne.s32.totalorder %s44, %s46
      %p50 = scmp.eq.s32.totalorder %s24, 0
      %p51 = por %p49, %p50
      %p52 = scmp.ne.s32.totalorder %s44, %s46
      %p53 = scmp.eq.s32.totalorder %s29, 3
      %p54 = por %p52, %p53
      %p55 = scmp.ne.s32.totalorder %s46, %s47
      %p56 = scmp.eq.s32.totalorder %s29, 0
      %p57 = por %p55, %p56
      %p58 = scmp.ne.s32.totalorder %s46, %s47
      %p59 = scmp.eq.s32.totalorder %s30, 3
      %p60 = por %p58, %p59
      %p62 = scmp.ne.s32.totalorder %s47, %s61
      %p63 = scmp.eq.s32.totalorder %s30, 0
      %p64 = por %p62, %p63
      %s66 = sadd.s32 %s65, 1
      %p69 = scmp.eq.s32.totalorder %s24, 3
      %p70 = scmp.ne.s32.totalorder %s65, %s67
      %p71 = scmp.eq.s32.totalorder %s24, 0
      %p72 = por %p70, %p71
      %p73 = scmp.ne.s32.totalorder %s65, %s67
      %p74 = scmp.eq.s32.totalorder %s29, 3
      %p75 = por %p73, %p74
      %p76 = scmp.ne.s32.totalorder %s67, %s68
      %p77 = scmp.eq.s32.totalorder %s29, 0
      %p78 = por %p76, %p77
      %p79 = scmp.ne.s32.totalorder %s67, %s68
      %p80 = scmp.eq.s32.totalorder %s30, 3
      %p81 = por %p79, %p80
      %p83 = scmp.ne.s32.totalorder %s68, %s82
      %p84 = scmp.eq.s32.totalorder %s30, 0
      %p85 = por %p83, %p84
      %s86 = smul.u32 %s31, 2
      %s87 = sadd.s32 %s86, %s32
      %s88 = smul.u32 %s43, 2
      %s89 = sadd.s32 %s88, %s39
      %s90 = ssub.s32 %s87, %s89
      %p91 = scmp.eq.s32.totalorder %s90, 0
      %s93 = sadd.s32 %s92, 1
      %s94 = scalar_select %p91, %s92, %s93
      %p97 = pneg %p91
      %p98 = scmp.eq.s32.totalorder %s24, 3
      %p99 = por %p97, %p98
      %p100 = scmp.ne.s32.totalorder %s92, %s95
      %p101 = scmp.eq.s32.totalorder %s24, 0
      %p102 = por %p100, %p101
      %p103 = scmp.ne.s32.totalorder %s92, %s95
      %p104 = scmp.eq.s32.totalorder %s29, 3
      %p105 = por %p103, %p104
      %p106 = scmp.ne.s32.totalorder %s95, %s96
      %p107 = scmp.eq.s32.totalorder %s29, 0
      %p108 = por %p106, %p107
      %p109 = scmp.ne.s32.totalorder %s95, %s96
      %p110 = scmp.eq.s32.totalorder %s30, 3
      %p111 = por %p109, %p110
      %p113 = scmp.ne.s32.totalorder %s96, %s112
      %p114 = scmp.eq.s32.totalorder %s30, 0
      %p115 = por %p113, %p114
      %s116 = smul.u32 %s31, 2
      %s117 = sadd.s32 %s116, %s32
      %s118 = smul.u32 %s43, 2
      %s119 = sadd.s32 %s118, %s39
      %s120 = ssub.s32 %s117, %s119
      %p121 = scmp.eq.s32.totalorder %s120, 0
      %s123 = sadd.s32 %s122, 1
      %s124 = scalar_select %p121, %s122, %s123
      %p127 = pneg %p121
      %p128 = scmp.eq.s32.totalorder %s24, 3
      %p129 = por %p127, %p128
      %p130 = scmp.ne.s32.totalorder %s122, %s125
      %p131 = scmp.eq.s32.totalorder %s24, 0
      %p132 = por %p130, %p131
      %p133 = scmp.ne.s32.totalorder %s122, %s125
      %p134 = scmp.eq.s32.totalorder %s29, 3
      %p135 = por %p133, %p134
      %p136 = scmp.ne.s32.totalorder %s125, %s126
      %p137 = scmp.eq.s32.totalorder %s29, 0
      %p138 = por %p136, %p137
      %p139 = scmp.ne.s32.totalorder %s125, %s126
      %p140 = scmp.eq.s32.totalorder %s30, 3
      %p141 = por %p139, %p140
      %p143 = scmp.ne.s32.totalorder %s126, %s142
      %p144 = scmp.eq.s32.totalorder %s30, 0
      %p145 = por %p143, %p144
      %s146 = ssub.s32 %s31, %s43
      %p147 = scmp.eq.s32.totalorder %s146, 0
      %s149 = sadd.s32 %s148, 1
      %s150 = scalar_select %p147, %s148, %s149
      %p153 = pneg %p147
      %p154 = scmp.eq.s32.totalorder %s24, 3
      %p155 = por %p153, %p154
      %p156 = scmp.ne.s32.totalorder %s148, %s151
      %p157 = scmp.eq.s32.totalorder %s24, 0
      %p158 = por %p156, %p157
      %p159 = scmp.ne.s32.totalorder %s148, %s151
      %p160 = scmp.eq.s32.totalorder %s29, 3
      %p161 = por %p159, %p160
      %p162 = scmp.ne.s32.totalorder %s151, %s152
      %p163 = scmp.eq.s32.totalorder %s29, 0
      %p164 = por %p162, %p163
      %p165 = scmp.ne.s32.totalorder %s151, %s152
      %p166 = scmp.eq.s32.totalorder %s30, 3
      %p167 = por %p165, %p166
      %p169 = scmp.ne.s32.totalorder %s152, %s168
      %p170 = scmp.eq.s32.totalorder %s30, 0
      %p171 = por %p169, %p170
      %s173 = sadd.s32 %s172, 1
      %p176 = scmp.eq.s32.totalorder %s24, 3
      %p177 = scmp.ne.s32.totalorder %s172, %s174
      %p178 = scmp.eq.s32.totalorder %s24, 0
      %p179 = por %p177, %p178
      %p180 = scmp.ne.s32.totalorder %s172, %s174
      %p181 = scmp.eq.s32.totalorder %s29, 3
      %p182 = por %p180, %p181
      %p183 = scmp.ne.s32.totalorder %s174, %s175
      %p184 = scmp.eq.s32.totalorder %s29, 0
      %p185 = por %p183, %p184
      %p186 = scmp.ne.s32.totalorder %s174, %s175
      %p187 = scmp.eq.s32.totalorder %s30, 3
      %p188 = por %p186, %p187
      %p190 = scmp.ne.s32.totalorder %s175, %s189
      %p191 = scmp.eq.s32.totalorder %s30, 0
      %p192 = por %p190, %p191
      %s194 = sadd.s32 %s193, 1
      %p197 = scmp.eq.s32.totalorder %s24, 3
      %p198 = scmp.ne.s32.totalorder %s193, %s195
      %p199 = scmp.eq.s32.totalorder %s24, 0
      %p200 = por %p198, %p199
      %p201 = scmp.ne.s32.totalorder %s193, %s195
      %p202 = scmp.eq.s32.totalorder %s29, 3
      %p203 = por %p201, %p202
      %p204 = scmp.ne.s32.totalorder %s195, %s196
      %p205 = scmp.eq.s32.totalorder %s29, 0
      %p206 = por %p204, %p205
      %p207 = scmp.ne.s32.totalorder %s195, %s196
      %p208 = scmp.eq.s32.totalorder %s30, 3
      %p209 = por %p207, %p208
      %p211 = scmp.ne.s32.totalorder %s196, %s210
      %p212 = scmp.eq.s32.totalorder %s30, 0
      %p213 = por %p211, %p212
      %s215 = sadd.s32 %s214, 1
      %p218 = scmp.eq.s32.totalorder %s24, 3
      %p219 = scmp.ne.s32.totalorder %s214, %s216
      %p220 = scmp.eq.s32.totalorder %s24, 0
      %p221 = por %p219, %p220
      %p222 = scmp.ne.s32.totalorder %s214, %s216
      %p223 = scmp.eq.s32.totalorder %s29, 3
      %p224 = por %p222, %p223
      %p225 = scmp.ne.s32.totalorder %s216, %s217
      %p226 = scmp.eq.s32.totalorder %s29, 0
      %p227 = por %p225, %p226
      %p228 = scmp.ne.s32.totalorder %s216, %s217
      %p229 = scmp.eq.s32.totalorder %s30, 3
      %p230 = por %p228, %p229
      %p232 = scmp.ne.s32.totalorder %s217, %s231
      %p233 = scmp.eq.s32.totalorder %s30, 0
      %p234 = por %p232, %p233
      %s236 = sadd.s32 %s235, 1
      %p239 = scmp.eq.s32.totalorder %s24, 3
      %p240 = scmp.ne.s32.totalorder %s235, %s237
      %p241 = scmp.eq.s32.totalorder %s24, 0
      %p242 = por %p240, %p241
      %p243 = scmp.ne.s32.totalorder %s235, %s237
      %p244 = scmp.eq.s32.totalorder %s29, 3
      %p245 = por %p243, %p244
      %p246 = scmp.ne.s32.totalorder %s237, %s238
      %p247 = scmp.eq.s32.totalorder %s29, 0
      %p248 = por %p246, %p247
      %p249 = scmp.ne.s32.totalorder %s237, %s238
      %p250 = scmp.eq.s32.totalorder %s30, 3
      %p251 = por %p249, %p250
      %p253 = scmp.ne.s32.totalorder %s238, %s252
      %p254 = scmp.eq.s32.totalorder %s30, 0
      %p255 = por %p253, %p254
      %s257 = sadd.s32 %s256, 1
      %p260 = scmp.eq.s32.totalorder %s24, 3
      %p261 = scmp.ne.s32.totalorder %s256, %s258
      %p262 = scmp.eq.s32.totalorder %s24, 0
      %p263 = por %p261, %p262
      %p264 = scmp.ne.s32.totalorder %s256, %s258
      %p265 = scmp.eq.s32.totalorder %s29, 3
      %p266 = por %p264, %p265
      %p267 = scmp.ne.s32.totalorder %s258, %s259
      %p268 = scmp.eq.s32.totalorder %s29, 0
      %p269 = por %p267, %p268
      %p270 = scmp.ne.s32.totalorder %s258, %s259
      %p271 = scmp.eq.s32.totalorder %s30, 3
      %p272 = por %p270, %p271
      %p274 = scmp.ne.s32.totalorder %s259, %s273
      %p275 = scmp.eq.s32.totalorder %s30, 0
      %p276 = por %p274, %p275
      %s278 = sadd.s32 %s277, 1
      %p281 = scmp.eq.s32.totalorder %s24, 3
      %p282 = scmp.ne.s32.totalorder %s277, %s279
      %p283 = scmp.eq.s32.totalorder %s24, 0
      %p284 = por %p282, %p283
      %p285 = scmp.ne.s32.totalorder %s277, %s279
      %p286 = scmp.eq.s32.totalorder %s29, 3
      %p287 = por %p285, %p286
      %p288 = scmp.ne.s32.totalorder %s279, %s280
      %p289 = scmp.eq.s32.totalorder %s29, 0
      %p290 = por %p288, %p289
      %p291 = scmp.ne.s32.totalorder %s279, %s280
      %p292 = scmp.eq.s32.totalorder %s30, 3
      %p293 = por %p291, %p292
      %p295 = scmp.ne.s32.totalorder %s280, %s294
      %p296 = scmp.eq.s32.totalorder %s30, 0
      %p297 = por %p295, %p296
      %s299 = sadd.s32 %s298, 1
      %p302 = scmp.eq.s32.totalorder %s24, 3
      %p303 = scmp.ne.s32.totalorder %s298, %s300
      %p304 = scmp.eq.s32.totalorder %s24, 0
      %p305 = por %p303, %p304
      %p306 = scmp.ne.s32.totalorder %s298, %s300
      %p307 = scmp.eq.s32.totalorder %s29, 3
      %p308 = por %p306, %p307
      %p309 = scmp.ne.s32.totalorder %s300, %s301
      %p310 = scmp.eq.s32.totalorder %s29, 0
      %p311 = por %p309, %p310
      %p312 = scmp.ne.s32.totalorder %s300, %s301
      %p313 = scmp.eq.s32.totalorder %s30, 3
      %p314 = por %p312, %p313
      %p316 = scmp.ne.s32.totalorder %s301, %s315
      %p317 = scmp.eq.s32.totalorder %s30, 0
      %p318 = por %p316, %p317
      %s320 = sadd.s32 %s319, 1
      %p323 = scmp.eq.s32.totalorder %s24, 3
      %p324 = scmp.ne.s32.totalorder %s319, %s321
      %p325 = scmp.eq.s32.totalorder %s24, 0
      %p326 = por %p324, %p325
      %p327 = scmp.ne.s32.totalorder %s319, %s321
      %p328 = scmp.eq.s32.totalorder %s29, 3
      %p329 = por %p327, %p328
      %p330 = scmp.ne.s32.totalorder %s321, %s322
      %p331 = scmp.eq.s32.totalorder %s29, 0
      %p332 = por %p330, %p331
      %p333 = scmp.ne.s32.totalorder %s321, %s322
      %p334 = scmp.eq.s32.totalorder %s30, 3
      %p335 = por %p333, %p334
      %p337 = scmp.ne.s32.totalorder %s322, %s336
      %p338 = scmp.eq.s32.totalorder %s30, 0
      %p339 = por %p337, %p338
      %s340 = ssub.s32 %s31, %s43
      %p341 = scmp.eq.s32.totalorder %s340, 0
      %s343 = sadd.s32 %s342, 1
      %s344 = scalar_select %p341, %s342, %s343
      %p347 = pneg %p341
      %p348 = scmp.eq.s32.totalorder %s24, 3
      %p349 = por %p347, %p348
      %p350 = scmp.ne.s32.totalorder %s342, %s345
      %p351 = scmp.eq.s32.totalorder %s24, 0
      %p352 = por %p350, %p351
      %p353 = scmp.ne.s32.totalorder %s342, %s345
      %p354 = scmp.eq.s32.totalorder %s29, 3
      %p355 = por %p353, %p354
      %p356 = scmp.ne.s32.totalorder %s345, %s346
      %p357 = scmp.eq.s32.totalorder %s29, 0
      %p358 = por %p356, %p357
      %p359 = scmp.ne.s32.totalorder %s345, %s346
      %p360 = scmp.eq.s32.totalorder %s30, 3
      %p361 = por %p359, %p360
      %p363 = scmp.ne.s32.totalorder %s346, %s362
      %p364 = scmp.eq.s32.totalorder %s30, 0
      %p365 = por %p363, %p364
      %p366 = scmp.le.s32.totalorder 1, %s24
      %p367 = scmp.lt.s32.totalorder %s24, 5
      %p368 = pnand %p366, %p367
      %p369 = pneg %p368
      // Predicated region
      $region9: #{tpu_custom_call.1} parent=5 // pred_check
        _
      $region10: #{tpu_custom_call.1} parent=5 // pred_check_branch
        %371 = sbr.rel (%p368) target = $region12
      $region11: #{tpu_custom_call.1} parent=5 // pred_region
        %s372 = ssub.s32 %s24, 1
        // Predicated region
        $region13: #{tpu_custom_call.1} parent=11 // pred_check
          %p373 = pneg %p57
        $region14: #{tpu_custom_call.1} parent=11 // pred_check_branch
          %375 = sbr.rel (%p373) target = $region16
        $region15: #{tpu_custom_call.1} parent=11 // pred_region
          _
        $region16: #{tpu_custom_call.1} parent=11 // pred_fallthru
          _
        // Predicated region
        $region17: #{tpu_custom_call.1} parent=11 // pred_check
          %p376 = pneg %p78
        $region18: #{tpu_custom_call.1} parent=11 // pred_check_branch
          %378 = sbr.rel (%p376) target = $region20
        $region19: #{tpu_custom_call.1} parent=11 // pred_region
          %s380 = ssub.s32 16, 16
          %381 = vsyncadd [#allocation8], %s380
          %s383 = sshll.u32 %s1, 4
          %s384 = int_to_ptr.vmem [resolvable:$true] %s383
          %386 = dma.vmem_to_smem %s384, 16, [#allocation6], [#allocation8]
        $region20: #{tpu_custom_call.1} parent=11 // pred_fallthru
          _
        // Predicated region
        $region21: #{tpu_custom_call.1} parent=11 // pred_check
          %p387 = pneg %p185
        $region22: #{tpu_custom_call.1} parent=11 // pred_check_branch
          %389 = sbr.rel (%p387) target = $region24
        $region23: #{tpu_custom_call.1} parent=11 // pred_region
          _
        $region24: #{tpu_custom_call.1} parent=11 // pred_fallthru
          _
        // Predicated region
        $region25: #{tpu_custom_call.1} parent=11 // pred_check
          %p390 = pneg %p206
        $region26: #{tpu_custom_call.1} parent=11 // pred_check_branch
          %392 = sbr.rel (%p390) target = $region28
        $region27: #{tpu_custom_call.1} parent=11 // pred_region
          _
        $region28: #{tpu_custom_call.1} parent=11 // pred_fallthru
          _
        // Predicated region
        $region29: #{tpu_custom_call.1} parent=11 // pred_check
          %p393 = pneg %p227
        $region30: #{tpu_custom_call.1} parent=11 // pred_check_branch
          %395 = sbr.rel (%p393) target = $region32
        $region31: #{tpu_custom_call.1} parent=11 // pred_region
          _
        $region32: #{tpu_custom_call.1} parent=11 // pred_fallthru
          _
        // Predicated region
        $region33: #{tpu_custom_call.1} parent=11 // pred_check
          %p396 = pneg %p248
        $region34: #{tpu_custom_call.1} parent=11 // pred_check_branch
          %398 = sbr.rel (%p396) target = $region36
        $region35: #{tpu_custom_call.1} parent=11 // pred_region
          _
        $region36: #{tpu_custom_call.1} parent=11 // pred_fallthru
          _
        // Predicated region
        $region37: #{tpu_custom_call.1} parent=11 // pred_check
          %p399 = pneg %p269
        $region38: #{tpu_custom_call.1} parent=11 // pred_check_branch
          %401 = sbr.rel (%p399) target = $region40
        $region39: #{tpu_custom_call.1} parent=11 // pred_region
          _
        $region40: #{tpu_custom_call.1} parent=11 // pred_fallthru
          _
        // Predicated region
        $region41: #{tpu_custom_call.1} parent=11 // pred_check
          %p402 = pneg %p290
        $region42: #{tpu_custom_call.1} parent=11 // pred_check_branch
          %404 = sbr.rel (%p402) target = $region44
        $region43: #{tpu_custom_call.1} parent=11 // pred_region
          _
        $region44: #{tpu_custom_call.1} parent=11 // pred_fallthru
          _
        // Predicated region
        $region45: #{tpu_custom_call.1} parent=11 // pred_check
          %p405 = pneg %p311
        $region46: #{tpu_custom_call.1} parent=11 // pred_check_branch
          %407 = sbr.rel (%p405) target = $region48
        $region47: #{tpu_custom_call.1} parent=11 // pred_region
          _
        $region48: #{tpu_custom_call.1} parent=11 // pred_fallthru
          _
        // Predicated region
        $region49: #{tpu_custom_call.1} parent=11 // pred_check
          %p408 = pneg %p332
        $region50: #{tpu_custom_call.1} parent=11 // pred_check_branch
          %410 = sbr.rel (%p408) target = $region52
        $region51: #{tpu_custom_call.1} parent=11 // pred_region
          _
        $region52: #{tpu_custom_call.1} parent=11 // pred_fallthru
          _
      $region12: #{tpu_custom_call.1} parent=5 // pred_fallthru
        _
      %p411 = scmp.lt.s32.totalorder %s24, 4
      // Predicated region
      $region53: #{tpu_custom_call.1} parent=5 // pred_check
        %p412 = pneg %p411
      $region54: #{tpu_custom_call.1} parent=5 // pred_check_branch
        %414 = sbr.rel (%p412) target = $region56
      $region55: #{tpu_custom_call.1} parent=5 // pred_region
        // Predicated region
        $region57: #{tpu_custom_call.1} parent=55 // pred_check
          %p415 = pneg %p102
        $region58: #{tpu_custom_call.1} parent=55 // pred_check_branch
          %417 = sbr.rel (%p415) target = $region60
        $region59: #{tpu_custom_call.1} parent=55 // pred_region
          %s418 = smul.u32 %s31, 2
          %s419 = sadd.s32 %s418, %s32
          %p420 = scmp.lt.s32.totalorder %s419, 3
          %s421 = scalar_select %p420, %s419, 3
          %s422 = scalar_lea.vmem %s2, %s421
          %s423 = smul.u32 %s31, 2
          %s424 = sadd.s32 %s423, %s32
        $region60: #{tpu_custom_call.1} parent=55 // pred_fallthru
          _
        // Predicated region
        $region61: #{tpu_custom_call.1} parent=55 // pred_check
          %p425 = pneg %p132
        $region62: #{tpu_custom_call.1} parent=55 // pred_check_branch
          %427 = sbr.rel (%p425) target = $region64
        $region63: #{tpu_custom_call.1} parent=55 // pred_region
          %s428 = smul.u32 %s31, 2
          %s429 = sadd.s32 %s428, %s32
          %p430 = scmp.lt.s32.totalorder %s429, 3
          %s431 = scalar_select %p430, %s429, 3
          %s432 = scalar_lea.vmem %s3, %s431
          %s433 = smul.u32 %s31, 2
          %s434 = sadd.s32 %s433, %s32
        $region64: #{tpu_custom_call.1} parent=55 // pred_fallthru
          _
        // Predicated region
        $region65: #{tpu_custom_call.1} parent=55 // pred_check
          %p435 = pneg %p158
        $region66: #{tpu_custom_call.1} parent=55 // pred_check_branch
          %437 = sbr.rel (%p435) target = $region68
        $region67: #{tpu_custom_call.1} parent=55 // pred_region
          %p438 = scmp.lt.s32.totalorder %s31, 1
          %s439 = scalar_select %p438, %s31, 1
          %s440 = smul.addr %s439, 2
          %s441 = smul.addr %s440, 8
          %s442 = scalar_lea.vmem %s4, %s441
        $region68: #{tpu_custom_call.1} parent=55 // pred_fallthru
          _
      $region56: #{tpu_custom_call.1} parent=5 // pred_fallthru
        _
      %p443 = scmp.le.s32.totalorder 1, %s24
      %p444 = scmp.lt.s32.totalorder %s24, 5
      %p445 = pnand %p443, %p444
      %p446 = pneg %p445
      // Predicated region
      $region69: #{tpu_custom_call.1} parent=5 // pred_check
        _
      $region70: #{tpu_custom_call.1} parent=5 // pred_check_branch
        %448 = sbr.rel (%p445) target = $region72
      $region71: #{tpu_custom_call.1} parent=5 // pred_region
        %s449 = ssub.s32 %s24, 1
        // Predicated region
        $region73: #{tpu_custom_call.1} parent=71 // pred_check
          %p450 = pneg %p78
        $region74: #{tpu_custom_call.1} parent=71 // pred_check_branch
          %452 = sbr.rel (%p450) target = $region76
        $region75: #{tpu_custom_call.1} parent=71 // pred_region
          %453 = dma.done [#allocation8], 16
        $region76: #{tpu_custom_call.1} parent=71 // pred_fallthru
          _
        %454 = sfence
        %p455 = pneg %p57
        %p456 = pneg %p54
        %p457 = pneg %p78
        %p458 = pneg %p75
        %s459 = smul.u32 %s33, 2
        %s460 = sadd.s32 %s459, %s34
        %p461 = scmp.lt.s32.totalorder %s460, 3
        %s462 = scalar_select %p461, %s460, 3
        %s463 = scalar_lea.vmem %s2, %s462
        %p464 = pneg %p108
        %p465 = pneg %p105
        %s466 = smul.u32 %s33, 2
        %s467 = sadd.s32 %s466, %s34
        %p468 = scmp.lt.s32.totalorder %s467, 3
        %s469 = scalar_select %p468, %s467, 3
        %s470 = scalar_lea.vmem %s3, %s469
        %p471 = pneg %p138
        %p472 = pneg %p135
        %p473 = scmp.lt.s32.totalorder %s33, 1
        %s474 = scalar_select %p473, %s33, 1
        %s475 = smul.addr %s474, 2
        %s476 = smul.addr %s475, 8
        %s477 = scalar_lea.vmem %s4, %s476
        %p478 = pneg %p164
        %p479 = pneg %p161
        %p480 = pneg %p185
        %p481 = pneg %p182
        %p482 = pneg %p206
        %p483 = pneg %p203
        %p484 = pneg %p227
        %p485 = pneg %p224
        %p486 = pneg %p248
        %p487 = pneg %p245
        %p488 = pneg %p269
        %p489 = pneg %p266
        %p490 = pneg %p290
        %p491 = pneg %p287
        %p492 = pneg %p311
        %p493 = pneg %p308
        %p494 = pneg %p332
        %p495 = pneg %p329
        %p496 = pneg %p358
        %p497 = pneg %p355
        %s498 = sand.u32 %s345, 1
        %s499 = scalar_lea.sflag [#allocation7], %s498
        %s500 = sand.u32 %s345, 1
        %s501 = smul.addr %s500, 16
        %s502 = scalar_lea.vmem [#allocation9], %s501
        %s503 = smul.u32 %s33, 2
        %s504 = sadd.s32 %s503, %s34
        %p505 = scmp.lt.s32.totalorder %s504, 3
        %s506 = scalar_select %p505, %s504, 3
        %s507 = scalar_lea.vmem %s2, %s506
        %s508 = smul.u32 %s33, 2
        %s509 = sadd.s32 %s508, %s34
        %s510 = smul.u32 %s33, 2
        %s511 = sadd.s32 %s510, %s34
        %p512 = scmp.lt.s32.totalorder %s511, 3
        %s513 = scalar_select %p512, %s511, 3
        %s514 = scalar_lea.vmem %s3, %s513
        %s515 = smul.u32 %s33, 2
        %s516 = sadd.s32 %s515, %s34
        %p517 = scmp.lt.s32.totalorder %s33, 1
        %s518 = scalar_select %p517, %s33, 1
        %s519 = smul.addr %s518, 2
        %s520 = smul.addr %s519, 8
        %s521 = scalar_lea.vmem %s4, %s520
        %p523 = scmp.eq.s32.totalorder %s34, 0
        // Predicated region
        $region77: #{tpu_custom_call.1} parent=71 // pred_check
          %p524 = pneg %p523
        $region78: #{tpu_custom_call.1} parent=71 // pred_check_branch
          %526 = sbr.rel (%p524) target = $region80
        $region79: #{tpu_custom_call.1} parent=71 // pred_region
          %v527 = vld [vmem:[%s521] sm:$0xff]
          %v528 = vld [vmem:[%s521 + $0x8] sm:$0xff]
          %v529 = vld [vmem:[%s5] sm:$0x1]
          %v530 = vld [vmem:[%s6] sm:$0x1]
          %vm531 = vcmask 261120
          %v532 = vsel %vm531, %v527, 0.0
          %533 = vadd.xlane.f32.xlu0 %v532
          %v534 = vpop.xlane.xlu0 %533
          %v535 = vsel %vm531, %v528, 0.0
          %536 = vadd.xlane.f32.xlu0 %v535
          %v537 = vpop.xlane.xlu0 %536
          %v538 = vrcp.pop 32.0
          %v539 = vmul.f32 %v534, %v538
          %v540 = vmul.f32 %v537, %v538
          %v541 = vsub.f32 %v527, %v539
          %v542 = vsub.f32 %v528, %v540
          %v543 = vmul.f32 %v541, %v541
          %v544 = vmul.f32 %v542, %v542
          %v545 = vsel %vm531, %v543, 0.0
          %546 = vadd.xlane.f32.xlu0 %v545
          %v547 = vpop.xlane.xlu0 %546
          %v548 = vsel %vm531, %v544, 0.0
          %549 = vadd.xlane.f32.xlu0 %v548
          %v550 = vpop.xlane.xlu0 %549
          %v551 = vmul.f32 %v547, %v538
          %v552 = vmul.f32 %v550, %v538
          %v553 = vadd.f32 %v551, 1e-05
          %v554 = vadd.f32 %v552, 1e-05
          %v555 = vrsqrt.pop %v553
          %v556 = vrsqrt.pop %v554
          %v557 = vmul.f32 %v541, %v555
          %v558 = vmul.f32 %v542, %v556
          %v560 = vlaneseq
          %v561 = vshrl.u32 %v560, 7
          %v562 = vsub.s32 0, %v561
          %v563 = vrot.slane %v529, %v562
          %v565 = vmul.f32 %v557, %v563
          %v566 = vmul.f32 %v558, %v563
          %v568 = vlaneseq
          %v569 = vshrl.u32 %v568, 7
          %v570 = vsub.s32 0, %v569
          %v571 = vrot.slane %v530, %v570
          %v573 = vadd.f32 %v565, %v571
          %v574 = vadd.f32 %v566, %v571
          %575 = vst.msk [vmem:[#allocation4] sm:$0xff] %vm531, %v573
          %576 = vst.msk [vmem:[#allocation4 + $0x8] sm:$0xff] %vm531, %v574
          %s577 = sld [smem:[#allocation5]]
          %v578 = vmax.f32 %v573, 0.0
          %v579 = vmax.f32 %v574, 0.0
          %v580 = vadd.f32 %v578, 1e-07
          %v581 = vadd.f32 %v579, 1e-07
          %v582 = vstv %s577
          %v583 = vmul.f32 %v580, %v582
          %v584 = vmul.f32 %v581, %v582
          %v585 = vsel %vm531, %v583, -inf
          %v586 = vsel %vm531, %v584, -inf
          %v587 = vmax.f32 %v585, %v586
          %588 = vmax.xlane.f32.xlu0 %v587
          %v589 = vpop.xlane.xlu0 %588
          %v590 = vrot.slane %v589, 4
          %v591 = vmax.f32 %v589, %v590
          %v592 = vrot.slane %v591, 2
          %v593 = vmax.f32 %v591, %v592
          %v594 = vrot.slane %v593, 1
          %v595 = vmax.f32 %v593, %v594
          %s596 = vtos %v595
          %v597 = vstv %s596
          %v598 = vsub.f32 %v583, %v597
          %v599 = vsub.f32 %v584, %v597
          %v600 = vmul.f32 %v598, 1.442695
          %v601 = vpow.pop %v600
          %v602 = vmul.f32 %v599, 1.442695
          %v603 = vpow.pop %v602
          %v604 = vmul.f32 %v580, %v601
          %v605 = vmul.f32 %v581, %v603
          %608 = vrot.lane.b32.xlu0 %v601, 32
          %v609 = vpop.permute.xlu0 %608
          %610 = vrot.lane.b32.xlu0 %v603, 32
          %v611 = vpop.permute.xlu0 %610
          %v614 = vsel %vm531, %v604, %v609
          %v615 = vsel %vm531, %v605, %v611
          %v616 = vpack.c.bf16 %v615, %v614
          %vm617 = vcmask 523264
          %618 = vst.msk [vmem:[#allocation3] sm:$0xff] %vm617, %v616
          %619 = vst.msk [vmem:[#allocation2] sm:$0xff] %vm617, 0.0
          %620 = vst.msk [vmem:[#allocation2 + $0x8] sm:$0xff] %vm617, 0.0
        $region80: #{tpu_custom_call.1} parent=71 // pred_fallthru
          _
        %v621 = vld [vmem:[%s507] sm:$0x1]
        %v622 = vld [vmem:[%s514] sm:$0x1]
        %v623 = vlaneseq
        %v624 = vshrl.u32 %v623, 7
        %v625 = vadd.s32 %v624, 8
        %v626 = vlaneseq
        %v627 = vshrl.u32 %v626, 7
        %v628 = vsub.s32 0, %v627
        %v629 = vrot.slane %v621, %v628
        %vm630 = vcmp.eq.s32.totalorder %v624, %v629
        %vm631 = vcmp.eq.s32.totalorder %v625, %v629
        %v632 = vsel %vm630, 1, 0
        %v633 = vsel %vm631, 1, 0
        %v634 = vcvt.s32.f32 %v632
        %v635 = vcvt.s32.f32 %v633
        %v636 = vpack.c.bf16 %v635, %v634
        %v637 = vlaneseq
        %v638 = vshrl.u32 %v637, 7
        %v639 = vsub.s32 0, %v638
        %v640 = vrot.slane %v622, %v639
        %vm641 = vcmp.eq.s32.totalorder %v624, %v640
        %vm642 = vcmp.eq.s32.totalorder %v625, %v640
        %v643 = vsel %vm641, 1, 0
        %v644 = vsel %vm642, 1, 0
        %v645 = vcvt.s32.f32 %v643
        %v646 = vcvt.s32.f32 %v644
        %v647 = vpack.c.bf16 %v646, %v645
        %v648 = vld [vmem:[#allocation3] sm:$0xff]
        %649 = vxpose.xlu0.c.b16.start [1/8] %v636, 128
        %650 = vxpose.xlu0.c.b16.cont [2/8] 0, 128
        %651 = vxpose.xlu0.c.b16.cont [3/8] 0, 128
        %652 = vxpose.xlu0.c.b16.cont [4/8] 0, 128
        %653 = vxpose.xlu0.c.b16.cont [5/8] 0, 128
        %654 = vxpose.xlu0.c.b16.cont [6/8] 0, 128
        %655 = vxpose.xlu0.c.b16.cont [7/8] 0, 128
        %656 = vxpose.xlu0.c.b16.end [8/8] 0, 128
        %v657 = vpop.trf.xlu0
        %v658 = vpop.trf.xlu0
        %v659 = vpop.trf.xlu0
        %v660 = vpop.trf.xlu0
        %v661 = vpop.trf.xlu0
        %v662 = vpop.trf.xlu0
        %v663 = vpop.trf.xlu0
        %v664 = vpop.trf.xlu0
        %vm665 = vcmask 130048
        %v667 = vsel %vm665, %v657, 0
        %v670 = vsel %vm665, %v658, 0
        %v673 = vsel %vm665, %v659, 0
        %v676 = vsel %vm665, %v660, 0
        %v679 = vsel %vm665, %v661, 0
        %v682 = vsel %vm665, %v662, 0
        %v685 = vsel %vm665, %v663, 0
        %v688 = vsel %vm665, %v664, 0
        %690 = vmatprep.subr.bf16.mxu0 0
        %691 = vmatpush1.bf16.msra.mxu0 %v648
        %692 = vmatprep.subr.bf16.mxu0 0
        %693 = vmatpush1.bf16.msra.mxu0 0
        %694 = vmatprep.subr.bf16.mxu0 0
        %695 = vmatpush1.bf16.msra.mxu0 0
        %696 = vmatprep.subr.bf16.mxu0 0
        %697 = vmatpush1.bf16.msra.mxu0 0
        %698 = vmatprep.subr.bf16.mxu0 0
        %699 = vmatpush1.bf16.msra.mxu0 0
        %700 = vmatprep.subr.bf16.mxu0 0
        %701 = vmatpush1.bf16.msra.mxu0 0
        %702 = vmatprep.subr.bf16.mxu0 0
        %703 = vmatpush1.bf16.msra.mxu0 0
        %704 = vmatprep.subr.bf16.mxu0 0
        %705 = vmatpush1.bf16.msra.mxu0 0
        %706 = vmatprep.subr.bf16.mxu0 0
        %707 = vmatpush1.bf16.msra.mxu0 0
        %708 = vmatprep.subr.bf16.mxu0 0
        %709 = vmatpush1.bf16.msra.mxu0 0
        %710 = vmatprep.subr.bf16.mxu0 0
        %711 = vmatpush1.bf16.msra.mxu0 0
        %712 = vmatprep.subr.bf16.mxu0 0
        %713 = vmatpush1.bf16.msra.mxu0 0
        %714 = vmatprep.subr.bf16.mxu0 0
        %715 = vmatpush1.bf16.msra.mxu0 0
        %716 = vmatprep.subr.bf16.mxu0 0
        %717 = vmatpush1.bf16.msra.mxu0 0
        %718 = vmatprep.subr.bf16.mxu0 0
        %719 = vmatpush1.bf16.msra.mxu0 0
        %720 = vmatprep.subr.bf16.mxu0 0
        %721 = vmatpush1.bf16.msra.mxu0 0
        %722 = vmatprep.mubr.bf16.mxu0 0
        %723 = vmatmul.mubr.bf16.gmra.mrb[0].mxu0 %v667
        %v724 = vpop.f32.mrb[0].mxu0
        %v725 = vadd.f32 0.0, %v724
        %v726 = vpop.f32.mrb[0].mxu0
        %v727 = vpop.f32.mrb[0].mxu0
        %v728 = vadd.f32 0.0, %v727
        %v729 = vpop.f32.mrb[0].mxu0
        %730 = vmatprep.mubr.bf16.mxu0 0
        %731 = vmatmul.mubr.bf16.gmra.mrb[0].mxu0 %v670
        %v732 = vpop.f32.mrb[0].mxu0
        %v733 = vadd.f32 0.0, %v732
        %v734 = vpop.f32.mrb[0].mxu0
        %v735 = vpop.f32.mrb[0].mxu0
        %v736 = vadd.f32 0.0, %v735
        %v737 = vpop.f32.mrb[0].mxu0
        %738 = vmatprep.mubr.bf16.mxu0 0
        %739 = vmatmul.mubr.bf16.gmra.mrb[0].mxu0 %v673
        %v740 = vpop.f32.mrb[0].mxu0
        %v741 = vadd.f32 0.0, %v740
        %v742 = vpop.f32.mrb[0].mxu0
        %v743 = vpop.f32.mrb[0].mxu0
        %v744 = vadd.f32 0.0, %v743
        %v745 = vpop.f32.mrb[0].mxu0
        %746 = vmatprep.mubr.bf16.mxu0 0
        %747 = vmatmul.mubr.bf16.gmra.mrb[0].mxu0 %v676
        %v748 = vpop.f32.mrb[0].mxu0
        %v749 = vadd.f32 0.0, %v748
        %v750 = vpop.f32.mrb[0].mxu0
        %v751 = vpop.f32.mrb[0].mxu0
        %v752 = vadd.f32 0.0, %v751
        %v753 = vpop.f32.mrb[0].mxu0
        %754 = vmatprep.mubr.bf16.mxu0 0
        %755 = vmatmul.mubr.bf16.gmra.mrb[0].mxu0 %v679
        %v756 = vpop.f32.mrb[0].mxu0
        %v757 = vadd.f32 0.0, %v756
        %v758 = vpop.f32.mrb[0].mxu0
        %v759 = vpop.f32.mrb[0].mxu0
        %v760 = vadd.f32 0.0, %v759
        %v761 = vpop.f32.mrb[0].mxu0
        %762 = vmatprep.mubr.bf16.mxu0 0
        %763 = vmatmul.mubr.bf16.gmra.mrb[0].mxu0 %v682
        %v764 = vpop.f32.mrb[0].mxu0
        %v765 = vadd.f32 0.0, %v764
        %v766 = vpop.f32.mrb[0].mxu0
        %v767 = vpop.f32.mrb[0].mxu0
        %v768 = vadd.f32 0.0, %v767
        %v769 = vpop.f32.mrb[0].mxu0
        %770 = vmatprep.mubr.bf16.mxu0 0
        %771 = vmatmul.mubr.bf16.gmra.mrb[0].mxu0 %v685
        %v772 = vpop.f32.mrb[0].mxu0
        %v773 = vadd.f32 0.0, %v772
        %v774 = vpop.f32.mrb[0].mxu0
        %v775 = vpop.f32.mrb[0].mxu0
        %v776 = vadd.f32 0.0, %v775
        %v777 = vpop.f32.mrb[0].mxu0
        %778 = vmatprep.mubr.bf16.mxu0 0
        %779 = vmatmul.mubr.bf16.gmra.mrb[0].mxu0 %v688
        %v780 = vpop.f32.mrb[0].mxu0
        %v781 = vadd.f32 0.0, %v780
        %v782 = vpop.f32.mrb[0].mxu0
        %v783 = vpop.f32.mrb[0].mxu0
        %v784 = vadd.f32 0.0, %v783
        %v785 = vpop.f32.mrb[0].mxu0
        %786 = vdwg.mxu0
        %v787 = vld [vmem:[#allocation2] sm:$0xff]
        %v788 = vld [vmem:[#allocation2 + $0x8] sm:$0xff]
        %v789 = vpack.c.bf16 %v728, %v725
        %v790 = vpack.c.bf16 %v736, %v733
        %v791 = vpack.c.bf16 %v744, %v741
        %v792 = vpack.c.bf16 %v752, %v749
        %v793 = vpack.c.bf16 %v760, %v757
        %v794 = vpack.c.bf16 %v768, %v765
        %v795 = vpack.c.bf16 %v776, %v773
        %v796 = vpack.c.bf16 %v784, %v781
        %797 = vmatprep.subr.bf16.mxu0 0
        %798 = vmatpush1.bf16.msra.mxu0 %v789
        %799 = vmatprep.subr.bf16.mxu0 0
        %800 = vmatpush1.bf16.msra.mxu0 %v790
        %801 = vmatprep.subr.bf16.mxu0 0
        %802 = vmatpush1.bf16.msra.mxu0 %v791
        %803 = vmatprep.subr.bf16.mxu0 0
        %804 = vmatpush1.bf16.msra.mxu0 %v792
        %805 = vmatprep.subr.bf16.mxu0 0
        %806 = vmatpush1.bf16.msra.mxu0 %v793
        %807 = vmatprep.subr.bf16.mxu0 0
        %808 = vmatpush1.bf16.msra.mxu0 %v794
        %809 = vmatprep.subr.bf16.mxu0 0
        %810 = vmatpush1.bf16.msra.mxu0 %v795
        %811 = vmatprep.subr.bf16.mxu0 0
        %812 = vmatpush1.bf16.msra.mxu0 %v796
        %813 = vmatprep.subr.bf16.mxu0 0
        %814 = vmatpush1.bf16.msra.mxu0 0
        %815 = vmatprep.subr.bf16.mxu0 0
        %816 = vmatpush1.bf16.msra.mxu0 0
        %817 = vmatprep.subr.bf16.mxu0 0
        %818 = vmatpush1.bf16.msra.mxu0 0
        %819 = vmatprep.subr.bf16.mxu0 0
        %820 = vmatpush1.bf16.msra.mxu0 0
        %821 = vmatprep.subr.bf16.mxu0 0
        %822 = vmatpush1.bf16.msra.mxu0 0
        %823 = vmatprep.subr.bf16.mxu0 0
        %824 = vmatpush1.bf16.msra.mxu0 0
        %825 = vmatprep.subr.bf16.mxu0 0
        %826 = vmatpush1.bf16.msra.mxu0 0
        %827 = vmatprep.subr.bf16.mxu0 0
        %828 = vmatpush1.bf16.msra.mxu0 0
        %829 = vmatprep.mubr.bf16.mxu0 0
        %830 = vmatmul.mubr.bf16.gmra.mrb[0].mxu0 %v647
        %v831 = vpop.f32.mrb[0].mxu0
        %v832 = vadd.f32 0.0, %v831
        %v833 = vpop.f32.mrb[0].mxu0
        %v834 = vpop.f32.mrb[0].mxu0
        %v835 = vadd.f32 0.0, %v834
        %v836 = vpop.f32.mrb[0].mxu0
        %837 = vdwg.mxu0
        %v838 = vadd.f32 %v787, %v832
        %v839 = vadd.f32 %v788, %v835
        %vm840 = vcmask 523264
        %841 = vst.msk [vmem:[#allocation2] sm:$0xff] %vm840, %v838
        %842 = vst.msk [vmem:[#allocation2 + $0x8] sm:$0xff] %vm840, %v839
        %p843 = scmp.eq.s32.totalorder %s34, 1
        // Predicated region
        $region81: #{tpu_custom_call.1} parent=71 // pred_check
          %p844 = pneg %p843
        $region82: #{tpu_custom_call.1} parent=71 // pred_check_branch
          %846 = sbr.rel (%p844) target = $region84
        $region83: #{tpu_custom_call.1} parent=71 // pred_region
          %v847 = vld [vmem:[#allocation4] sm:$0xff]
          %v848 = vld [vmem:[#allocation4 + $0x8] sm:$0xff]
          %v849 = vld [vmem:[#allocation2] sm:$0xff]
          %v850 = vld [vmem:[#allocation2 + $0x8] sm:$0xff]
          %v851 = vadd.f32 %v849, 1e-16
          %v852 = vadd.f32 %v850, 1e-16
          %v853 = vrcp.pop %v851
          %v854 = vrcp.pop %v852
          %857 = vrot.lane.b32.xlu0 %v853, 96
          %v858 = vpop.permute.xlu0 %857
          %859 = vrot.lane.b32.xlu0 %v854, 96
          %v860 = vpop.permute.xlu0 %859
          %v863 = vmul.f32 %v849, %v858
          %v864 = vmul.f32 %v850, %v860
          %v865 = vadd.f32 %v863, %v847
          %v866 = vadd.f32 %v864, %v848
          %v867 = vpack.c.bf16 %v866, %v865
          %v868 = vld [vmem:[%s7] sm:$0xf]
          %v869 = vld [vmem:[%s7 + $0x4] sm:$0xf]
          %v870 = vld [vmem:[%s7 + $0x8] sm:$0xf]
          %v871 = vld [vmem:[%s7 + $0xc] sm:$0xf]
          %v872 = vld [vmem:[%s8] sm:$0x1]
          %v874 = vlaneseq
          %v875 = vshrl.u32 %v874, 7
          %v876 = vsub.s32 0, %v875
          %v877 = vrot.slane %v872, %v876
          %v883 = vunpack.c.l.b16 %v868
          %v884 = vunpack.c.l.b16 %v869
          %v885 = vunpack.c.l.b16 %v870
          %v886 = vunpack.c.l.b16 %v871
          %v887 = vpack.c.b16 %v884, %v883
          %v888 = vpack.c.b16 %v886, %v885
          %vm891 = vcmask 261120
          %v893 = vsel %vm891, %v867, 0
          %895 = vmatprep.subr.bf16.mxu0 0
          %896 = vmatpush1.bf16.msra.mxu0 %v887
          %897 = vmatprep.subr.bf16.mxu0 0
          %898 = vmatpush1.bf16.msra.mxu0 %v888
          %899 = vmatprep.subr.bf16.mxu0 0
          %900 = vmatpush1.bf16.msra.mxu0 0
          %901 = vmatprep.subr.bf16.mxu0 0
          %902 = vmatpush1.bf16.msra.mxu0 0
          %903 = vmatprep.subr.bf16.mxu0 0
          %904 = vmatpush1.bf16.msra.mxu0 0
          %905 = vmatprep.subr.bf16.mxu0 0
          %906 = vmatpush1.bf16.msra.mxu0 0
          %907 = vmatprep.subr.bf16.mxu0 0
          %908 = vmatpush1.bf16.msra.mxu0 0
          %909 = vmatprep.subr.bf16.mxu0 0
          %910 = vmatpush1.bf16.msra.mxu0 0
          %911 = vmatprep.subr.bf16.mxu0 0
          %912 = vmatpush1.bf16.msra.mxu0 0
          %913 = vmatprep.subr.bf16.mxu0 0
          %914 = vmatpush1.bf16.msra.mxu0 0
          %915 = vmatprep.subr.bf16.mxu0 0
          %916 = vmatpush1.bf16.msra.mxu0 0
          %917 = vmatprep.subr.bf16.mxu0 0
          %918 = vmatpush1.bf16.msra.mxu0 0
          %919 = vmatprep.subr.bf16.mxu0 0
          %920 = vmatpush1.bf16.msra.mxu0 0
          %921 = vmatprep.subr.bf16.mxu0 0
          %922 = vmatpush1.bf16.msra.mxu0 0
          %923 = vmatprep.subr.bf16.mxu0 0
          %924 = vmatpush1.bf16.msra.mxu0 0
          %925 = vmatprep.subr.bf16.mxu0 0
          %926 = vmatpush1.bf16.msra.mxu0 0
          %927 = vmatprep.mubr.bf16.mxu0 0
          %928 = vmatmul.mubr.bf16.gmra.mrb[0].mxu0 %v893
          %v929 = vpop.f32.mrb[0].mxu0
          %v930 = vadd.f32 %v877, %v929
          %v931 = vpop.f32.mrb[0].mxu0
          %v932 = vpop.f32.mrb[0].mxu0
          %v933 = vadd.f32 %v877, %v932
          %v934 = vpop.f32.mrb[0].mxu0
          %935 = vdwg.mxu0
          %v936 = vld [vmem:[%s9] sm:$0x1]
          %v937 = vld [vmem:[%s10] sm:$0x1]
          %v938 = vsel %vm840, %v930, 0.0
          %939 = vadd.xlane.f32.xlu0 %v938
          %v940 = vpop.xlane.xlu0 %939
          %v941 = vsel %vm840, %v933, 0.0
          %942 = vadd.xlane.f32.xlu0 %v941
          %v943 = vpop.xlane.xlu0 %942
          %v944 = vrcp.pop 64.0
          %v945 = vmul.f32 %v940, %v944
          %v946 = vmul.f32 %v943, %v944
          %v947 = vsub.f32 %v930, %v945
          %v948 = vsub.f32 %v933, %v946
          %v949 = vmul.f32 %v947, %v947
          %v950 = vmul.f32 %v948, %v948
          %v951 = vsel %vm840, %v949, 0.0
          %952 = vadd.xlane.f32.xlu0 %v951
          %v953 = vpop.xlane.xlu0 %952
          %v954 = vsel %vm840, %v950, 0.0
          %955 = vadd.xlane.f32.xlu0 %v954
          %v956 = vpop.xlane.xlu0 %955
          %v957 = vmul.f32 %v953, %v944
          %v958 = vmul.f32 %v956, %v944
          %v959 = vadd.f32 %v957, 1e-05
          %v960 = vadd.f32 %v958, 1e-05
          %v961 = vrsqrt.pop %v959
          %v962 = vrsqrt.pop %v960
          %v963 = vmul.f32 %v947, %v961
          %v964 = vmul.f32 %v948, %v962
          %v966 = vlaneseq
          %v967 = vshrl.u32 %v966, 7
          %v968 = vsub.s32 0, %v967
          %v969 = vrot.slane %v936, %v968
          %v971 = vmul.f32 %v963, %v969
          %v972 = vmul.f32 %v964, %v969
          %v974 = vlaneseq
          %v975 = vshrl.u32 %v974, 7
          %v976 = vsub.s32 0, %v975
          %v977 = vrot.slane %v937, %v976
          %v979 = vadd.f32 %v971, %v977
          %v980 = vadd.f32 %v972, %v977
          %v981 = vmax.f32 %v979, 0.0
          %v982 = vmax.f32 %v980, 0.0
          %v983 = vpack.c.bf16 %v982, %v981
          %v984 = vld [vmem:[%s11] sm:$0xf]
          %v985 = vld [vmem:[%s11 + $0x4] sm:$0xf]
          %v986 = vld [vmem:[%s11 + $0x8] sm:$0xf]
          %v987 = vld [vmem:[%s11 + $0xc] sm:$0xf]
          %v988 = vld [vmem:[%s11 + $0x10] sm:$0xf]
          %v989 = vld [vmem:[%s11 + $0x14] sm:$0xf]
          %v990 = vld [vmem:[%s11 + $0x18] sm:$0xf]
          %v991 = vld [vmem:[%s11 + $0x1c] sm:$0xf]
          %v992 = vld [vmem:[%s12] sm:$0x1]
          %v994 = vlaneseq
          %v995 = vshrl.u32 %v994, 7
          %v996 = vsub.s32 0, %v995
          %v997 = vrot.slane %v992, %v996
          %v1007 = vunpack.c.l.b16 %v984
          %v1008 = vunpack.c.l.b16 %v985
          %v1009 = vunpack.c.l.b16 %v986
          %v1010 = vunpack.c.l.b16 %v987
          %v1011 = vunpack.c.l.b16 %v988
          %v1012 = vunpack.c.l.b16 %v989
          %v1013 = vunpack.c.l.b16 %v990
          %v1014 = vunpack.c.l.b16 %v991
          %v1015 = vpack.c.b16 %v1008, %v1007
          %v1016 = vpack.c.b16 %v1010, %v1009
          %v1017 = vpack.c.b16 %v1012, %v1011
          %v1018 = vpack.c.b16 %v1014, %v1013
          %v1024 = vsel %vm840, %v983, 0
          %1026 = vmatprep.subr.bf16.mxu0 0
          %1027 = vmatpush1.bf16.msra.mxu0 %v1015
          %1028 = vmatprep.subr.bf16.mxu0 0
          %1029 = vmatpush1.bf16.msra.mxu0 %v1016
          %1030 = vmatprep.subr.bf16.mxu0 0
          %1031 = vmatpush1.bf16.msra.mxu0 %v1017
          %1032 = vmatprep.subr.bf16.mxu0 0
          %1033 = vmatpush1.bf16.msra.mxu0 %v1018
          %1034 = vmatprep.subr.bf16.mxu0 0
          %1035 = vmatpush1.bf16.msra.mxu0 0
          %1036 = vmatprep.subr.bf16.mxu0 0
          %1037 = vmatpush1.bf16.msra.mxu0 0
          %1038 = vmatprep.subr.bf16.mxu0 0
          %1039 = vmatpush1.bf16.msra.mxu0 0
          %1040 = vmatprep.subr.bf16.mxu0 0
          %1041 = vmatpush1.bf16.msra.mxu0 0
          %1042 = vmatprep.subr.bf16.mxu0 0
          %1043 = vmatpush1.bf16.msra.mxu0 0
          %1044 = vmatprep.subr.bf16.mxu0 0
          %1045 = vmatpush1.bf16.msra.mxu0 0
          %1046 = vmatprep.subr.bf16.mxu0 0
          %1047 = vmatpush1.bf16.msra.mxu0 0
          %1048 = vmatprep.subr.bf16.mxu0 0
          %1049 = vmatpush1.bf16.msra.mxu0 0
          %1050 = vmatprep.subr.bf16.mxu0 0
          %1051 = vmatpush1.bf16.msra.mxu0 0
          %1052 = vmatprep.subr.bf16.mxu0 0
          %1053 = vmatpush1.bf16.msra.mxu0 0
          %1054 = vmatprep.subr.bf16.mxu0 0
          %1055 = vmatpush1.bf16.msra.mxu0 0
          %1056 = vmatprep.subr.bf16.mxu0 0
          %1057 = vmatpush1.bf16.msra.mxu0 0
          %1058 = vmatprep.mubr.bf16.mxu0 0
          %1059 = vmatmul.mubr.bf16.gmra.mrb[0].mxu0 %v1024
          %v1060 = vpop.f32.mrb[0].mxu0
          %v1061 = vadd.f32 %v997, %v1060
          %v1062 = vpop.f32.mrb[0].mxu0
          %v1063 = vpop.f32.mrb[0].mxu0
          %v1064 = vadd.f32 %v997, %v1063
          %v1065 = vpop.f32.mrb[0].mxu0
          %1066 = vdwg.mxu0
          %v1067 = vld [vmem:[%s521] sm:$0xff]
          %v1068 = vld [vmem:[%s521 + $0x8] sm:$0xff]
          %v1069 = vadd.f32 %v1067, %v1061
          %v1070 = vadd.f32 %v1068, %v1064
          %s1071 = sld [smem:[#allocation6 + %s33]]
          %v1072 = vstv %s1071
          %vm1073 = vcmp.lt.s32.totalorder %v624, %v1072
          %vm1074 = vcmp.lt.s32.totalorder %v625, %v1072
          %v1075 = vsel %vm1073, %v1069, 0.0
          %v1076 = vsel %vm1074, %v1070, 0.0
          %1077 = vst.msk [vmem:[%s502] sm:$0xff] %vm891, %v1075
          %1078 = vst.msk [vmem:[%s502 + $0x8] sm:$0xff] %vm891, %v1076
        $region84: #{tpu_custom_call.1} parent=71 // pred_fallthru
          _
        %s1079 = sand.u32 %s345, 1
        %s1080 = scalar_lea.sflag [#allocation7], %s1079
        %s1081 = sand.u32 %s345, 1
        %s1082 = smul.addr %s1081, 16
        %s1083 = scalar_lea.vmem [#allocation9], %s1082
        // Predicated region
        $region85: #{tpu_custom_call.1} parent=71 // pred_check
          %p1084 = pneg %p355
        $region86: #{tpu_custom_call.1} parent=71 // pred_check_branch
          %1086 = sbr.rel (%p1084) target = $region88
        $region87: #{tpu_custom_call.1} parent=71 // pred_region
          %s1088 = ssub.s32 256, 256
          %1089 = vsyncadd %s1080, %s1088
          %s1090 = smul.addr %s33, 2
          %s1091 = smul.addr %s1090, 128
          %s1092 = scalar_lea.hbm %s13, %s1091
          %s1093 = sshll.u32 %s1083, 4
          %s1094 = int_to_ptr.vmem [resolvable:$true] %s1093
          %1099 = dma.vmem_to_hbm [thread:$0]  %s1094, 256, %s1092, %s1080, 128, 128, 8
        $region88: #{tpu_custom_call.1} parent=71 // pred_fallthru
          _
      $region72: #{tpu_custom_call.1} parent=5 // pred_fallthru
        _
      %p1100 = scmp.le.s32.totalorder 2, %s24
      // Predicated region
      $region89: #{tpu_custom_call.1} parent=5 // pred_check
        %p1101 = pneg %p1100
      $region90: #{tpu_custom_call.1} parent=5 // pred_check_branch
        %1103 = sbr.rel (%p1101) target = $region92
      $region91: #{tpu_custom_call.1} parent=5 // pred_region
        %s1104 = ssub.s32 %s24, 2
        // Predicated region
        $region93: #{tpu_custom_call.1} parent=91 // pred_check
          %p1105 = pneg %p361
        $region94: #{tpu_custom_call.1} parent=91 // pred_check_branch
          %1107 = sbr.rel (%p1105) target = $region96
        $region95: #{tpu_custom_call.1} parent=91 // pred_region
          %s1108 = sand.u32 %s346, 1
          %s1109 = scalar_lea.sflag [#allocation7], %s1108
          %s1110 = sand.u32 %s346, 1
          %s1111 = smul.addr %s1110, 16
          %s1112 = scalar_lea.vmem [#allocation9], %s1111
          %1113 = dma.done %s1109, 256
        $region96: #{tpu_custom_call.1} parent=91 // pred_fallthru
          _
      $region92: #{tpu_custom_call.1} parent=5 // pred_fallthru
        _
    $region6: #{tpu_custom_call.1} parent=1 // loop_footer
      %s28 = sadd.s32 1, %s24
    $region7: #{tpu_custom_call.1} parent=1 // loop_footer_branch
      %23 = sbr.rel target = $region3
    $region8: #{tpu_custom_call.1} parent=1 // loop_exit
      _
    %1114 = vsyncpa [#allocation7], 1
    %s1115 = scalar_lea.sflag [#allocation7], 1
    %1116 = vsyncpa %s1115, 1
    %1117 = vsyncpa [#allocation8], 1
    %s1118 = scalar_lea.sflag [#allocation8], 1
    %1119 = vsyncpa %s1118, 1

</llo_original>
